<compile_context>
chip_gen: v7x
topology: tpu7x:2x2x1
jax: 0.10.0
libtpu: 0.0.40
codegen_flags: <defaults>
</compile_context>

<pallas_src>
import functools

import numpy as np
import jax
import jax.numpy as jnp
from jax import lax
from jax.experimental import pallas as pl
from jax.experimental.pallas import tpu as pltpu


def _round_up(x, m):
    return (x + m - 1) // m * m


def _fold_bn(gamma, beta, mean, var, eps=1e-5):
    scale = gamma / jnp.sqrt(var + eps)
    shift = beta - mean * scale
    return scale.astype(jnp.float32), shift.astype(jnp.float32)


def _make_taps(D, H, W, L):
    """Static flat-index offsets + validity masks for the 27 conv taps."""
    HW, DHW = H * W, D * H * W
    p = np.arange(L)
    d, h, w = p // HW, (p // W) % H, p % W
    offs, masks = [], np.zeros((27, L), np.float32)
    k = 0
    for kd in (-1, 0, 1):
        for kh in (-1, 0, 1):
            for kw in (-1, 0, 1):
                offs.append(kd * HW + kh * W + kw)
                valid = ((p < DHW)
                         & (d + kd >= 0) & (d + kd < D)
                         & (h + kh >= 0) & (h + kh < H)
                         & (w + kw >= 0) & (w + kw < W))
                masks[k] = valid.astype(np.float32)
                k += 1
    return tuple(offs), jnp.asarray(masks)


def _pack_conv3_weight(w_eff, cin_p, cout_rows):
    """Torch (Cout,Cin,3,3,3) (BN already folded) -> (cout_rows, 27*cin_p) bf16."""
    cout, cin = w_eff.shape[:2]
    w = jnp.pad(w_eff, ((0, cout_rows - cout), (0, cin_p - cin),
                        (0, 0), (0, 0), (0, 0)))
    w = jnp.transpose(w, (2, 3, 4, 1, 0)).reshape(27 * cin_p, cout_rows)
    return jnp.transpose(w, (1, 0)).astype(jnp.bfloat16)


# ---------------------------------------------------------------------------
# Fused kernel: one grid step == one batch item.
# ---------------------------------------------------------------------------
def _res_block_kernel(x_ref, masks_ref, w1_ref, b1_ref, w2_ref, b2_ref,
                      out_ref, *, offs, residual_mode, cout):
    L = x_ref.shape[-1]

    def im2col(src_f32):
        # src_f32: (C, L) f32 -> list of 27 masked, lane-rolled (C, L) slabs.
        slabs = []
        for k, off in enumerate(offs):
            if off == 0:
                # Centre tap: out-of-volume columns only pollute lanes that the
                # wrapper slices away, so no mask multiply is needed.
                slabs.append(src_f32)
            else:
                slab = pltpu.roll(src_f32, shift=(-off) % L, axis=1)
                slabs.append(slab * masks_ref[k:k + 1, :])   # zero-pad mask
        return slabs

    x = x_ref[...]                                           # (Cin_p, L) f32

    # conv1 + bn1(folded) + relu.
    # TODO(synk): nn.Dropout(p=0.2) is identity in eval mode; not applied here.
    xcat1 = jnp.concatenate(im2col(x), axis=0).astype(jnp.bfloat16)
    y1 = jnp.maximum(
        jnp.dot(w1_ref[...], xcat1, preferred_element_type=jnp.float32)
        + b1_ref[...], 0.0)                                  # (Cmid_p, L) f32

    # conv2 + bn2(folded)  [+ 1x1x1 downsample conv+bn fused into same matmul]
    slabs2 = im2col(y1)
    if residual_mode == "conv":
        slabs2.append(x)          # residual 1x1x1 conv rides the same MXU pass
    xcat2 = jnp.concatenate(slabs2, axis=0).astype(jnp.bfloat16)
    y2 = jnp.dot(w2_ref[...], xcat2,
                 preferred_element_type=jnp.float32) + b2_ref[...]

    if residual_mode == "identity":   # downsample is None -> out += x (exact f32)
        y2 = y2 + x[:cout, :]
    # residual_mode == "none": no residual add (no_downsample=True)

    out_ref[...] = jnp.maximum(y2, 0.0).astype(out_ref.dtype)


# ---------------------------------------------------------------------------
# Wrapper (NCDHW in / NCDHW out, like the PyTorch module, eval mode, stride=1)
# ---------------------------------------------------------------------------
def res_block_forward(x_ncdhw, params, *, no_downsample=False, stride=1):
    if stride != 1:
        # TODO(synk): stride != 1 (downsampled spatial dims) not implemented.
        raise NotImplementedError("only stride=1 is implemented")

    N, Cin, D, H, W = x_ncdhw.shape
    Cout = params["w1"].shape[0]
    DHW = D * H * W
    L = _round_up(DHW, 128)        # lane-dense flat spatial length
    Cin_p = _round_up(Cin, 8)      # sublane-aligned channel counts
    Cmid_p = _round_up(Cout, 8)

    if no_downsample:
        residual_mode = "none"
    elif Cin != Cout:
        residual_mode = "conv"
    else:
        residual_mode = "identity"

    # --- operand prep (activation is only reshaped / zero-padded once) ------
    x_flat = x_ncdhw.astype(jnp.float32).reshape(N, Cin, DHW)
    x_flat = jnp.pad(x_flat, ((0, 0), (0, Cin_p - Cin), (0, L - DHW)))

    offs, masks = _make_taps(D, H, W, L)

    s1, b1 = _fold_bn(*params["bn1"])
    s2, b2 = _fold_bn(*params["bn2"])
    w1_cat = _pack_conv3_weight(params["w1"] * s1[:, None, None, None, None],
                                Cin_p, Cmid_p)
    w2_cat = _pack_conv3_weight(params["w2"] * s2[:, None, None, None, None],
                                Cmid_p, Cout)
    b1 = jnp.pad(b1, (0, Cmid_p - Cout)).reshape(Cmid_p, 1)
    b2 = b2.reshape(Cout, 1)

    if residual_mode == "conv":
        # Fold the 1x1x1 downsample conv + bn into the conv2 matmul: append its
        # weights along K and its bias onto b2 (input slab appended in-kernel).
        sd, bd = _fold_bn(*params["bnd"])
        wd = params["wd"][:, :, 0, 0, 0] * sd[:, None]
        wd_cat = jnp.pad(wd, ((0, 0), (0, Cin_p - Cin))).astype(jnp.bfloat16)
        w2_cat = jnp.concatenate([w2_cat, wd_cat], axis=1)
        b2 = b2 + bd.reshape(Cout, 1)
    K2 = w2_cat.shape[1]

    kernel = functools.partial(_res_block_kernel, offs=offs,
                               residual_mode=residual_mode, cout=Cout)

    k2_extra = Cin if residual_mode == "conv" else 0
    flops = int(2 * N * DHW * Cout * (27 * Cin + 27 * Cout + k2_extra))
    bytes_accessed = int(
        N * 4 * (Cin_p * L + Cout * L)
        + 4 * masks.size
        + 2 * (w1_cat.size + w2_cat.size)
        + 4 * (b1.size + b2.size))

    out_flat = pl.pallas_call(
        kernel,
        out_shape=jax.ShapeDtypeStruct((N, Cout, L), jnp.float32),
        grid=(N,),
        in_specs=[
            pl.BlockSpec((None, Cin_p, L), lambda n: (n, 0, 0)),      # x
            pl.BlockSpec((27, L), lambda n: (0, 0)),                  # tap masks
            pl.BlockSpec((Cmid_p, 27 * Cin_p), lambda n: (0, 0)),     # w1 (bf16)
            pl.BlockSpec((Cmid_p, 1), lambda n: (0, 0)),              # b1
            pl.BlockSpec((Cout, K2), lambda n: (0, 0)),               # w2 (+wd) bf16
            pl.BlockSpec((Cout, 1), lambda n: (0, 0)),                # b2 (+bd)
        ],
        out_specs=pl.BlockSpec((None, Cout, L), lambda n: (n, 0, 0)),
        compiler_params=pltpu.CompilerParams(
            dimension_semantics=("parallel",)),
        cost_estimate=pl.CostEstimate(flops=flops, transcendentals=0,
                                      bytes_accessed=bytes_accessed),
    )(x_flat, masks, w1_cat, b1, w2_cat, b2)

    return out_flat[:, :, :DHW].reshape(N, Cout, D, H, W)


# ---------------------------------------------------------------------------
# Matched-precision reference (independent lax.conv path, same bf16-operand /
# f32-accumulate policy as the kernel) - for verification only.
# ---------------------------------------------------------------------------
def _ref_forward(x_ncdhw, params, *, no_downsample=False):
    x = x_ncdhw.astype(jnp.float32)
    dn = ("NCDHW", "OIDHW", "NCDHW")

    def conv(inp, w_eff, pad):
        return lax.conv_general_dilated(
            inp.astype(jnp.bfloat16), w_eff.astype(jnp.bfloat16),
            window_strides=(1, 1, 1), padding=pad, dimension_numbers=dn,
            preferred_element_type=jnp.float32)

    def chan(v):
        return v.reshape(1, -1, 1, 1, 1)

    s1, b1 = _fold_bn(*params["bn1"])
    s2, b2 = _fold_bn(*params["bn2"])
    p3 = [(1, 1)] * 3

    out = conv(x, params["w1"] * s1[:, None, None, None, None], p3) + chan(b1)
    out = jax.nn.relu(out)                 # dropout(p=0.2) = identity in eval
    out = conv(out, params["w2"] * s2[:, None, None, None, None], p3) + chan(b2)

    Cin, Cout = x.shape[1], params["w1"].shape[0]
    if not no_downsample:
        if Cin != Cout:
            sd, bd = _fold_bn(*params["bnd"])
            resid = conv(x, params["wd"] * sd[:, None, None, None, None],
                         [(0, 0)] * 3) + chan(bd)
        else:
            resid = x
        out = out + resid
    return jax.nn.relu(out)


# ---------------------------------------------------------------------------
if __name__ == "__main__":
    key = jax.random.PRNGKey(0)
    D, H, W = 8, 8, 8
    N = 2

    def bn_params(k, c):
        k1, k2, k3, k4 = jax.random.split(k, 4)
        return (jax.random.uniform(k1, (c,), jnp.float32, 0.5, 1.5),
                0.1 * jax.random.normal(k2, (c,), jnp.float32),
                0.1 * jax.random.normal(k3, (c,), jnp.float32),
                jax.random.uniform(k4, (c,), jnp.float32, 0.5, 1.5))

    def make_params(k, cin, cout):
        ks = jax.random.split(k, 6)
        return {
            "w1": 0.1 * jax.random.normal(ks[0], (cout, cin, 3, 3, 3), jnp.float32),
            "w2": 0.1 * jax.random.normal(ks[1], (cout, cout, 3, 3, 3), jnp.float32),
            "wd": 0.1 * jax.random.normal(ks[2], (cout, cin, 1, 1, 1), jnp.float32),
            "bn1": bn_params(ks[3], cout),
            "bn2": bn_params(ks[4], cout),
            "bnd": bn_params(ks[5], cout),
        }

    ok = True
    # Case 1: Cin != Cout -> 1x1x1 downsample conv + bn on the residual path.
    k1, k2, kx1, kx2 = jax.random.split(key, 4)
    Cin, Cout = 4, 8
    params = make_params(k1, Cin, Cout)
    x = jax.random.normal(kx1, (N, Cin, D, H, W), jnp.float32)
    out = jax.block_until_ready(res_block_forward(x, params))
    ref = jax.block_until_ready(_ref_forward(x, params))
    assert out.shape == (N, Cout, D, H, W)
    err = jnp.max(jnp.abs(out - ref))
    ok &= bool(jnp.allclose(out, ref, atol=5e-3, rtol=5e-3))
    assert ok, f"conv-residual case: max abs err {err}"

    # Case 2: Cin == Cout -> identity residual (downsample is None).
    Cin = Cout = 8
    params = make_params(k2, Cin, Cout)
    x = jax.random.normal(kx2, (N, Cin, D, H, W), jnp.float32)
    out = jax.block_until_ready(res_block_forward(x, params))
    ref = jax.block_until_ready(_ref_forward(x, params))
    assert out.shape == (N, Cout, D, H, W)
    err = jnp.max(jnp.abs(out - ref))
    ok &= bool(jnp.allclose(out, ref, atol=5e-3, rtol=5e-3))
    assert ok, f"identity-residual case: max abs err {err}"

    print("KERNEL_OK")
</pallas_src>

<mosaic_0001>
module attributes {stable_mosaic.version = 11 : i64} {
  func.func @_res_block_kernel(%arg0: i32, %arg1: memref<1x8x512xf32, #tpu.memory_space<vmem>>, %arg2: memref<27x512xf32, #tpu.memory_space<vmem>>, %arg3: memref<8x216xbf16, #tpu.memory_space<vmem>>, %arg4: memref<8x1xf32, #tpu.memory_space<vmem>>, %arg5: memref<8x224xbf16, #tpu.memory_space<vmem>>, %arg6: memref<8x1xf32, #tpu.memory_space<vmem>>, %arg7: memref<1x8x512xf32, #tpu.memory_space<vmem>>) attributes {dimension_semantics = [#tpu.dimension_semantics<parallel>], iteration_bounds = array<i64: 2>, scalar_prefetch = 0 : i64, scratch_operands = 0 : i64, tpu.core_type = #tpu.core_type<tc>, window_params = [{transform_indices = @transform_0, window_bounds = array<i64: 1, 8, 512>}, {pipeline_mode = #tpu.pipeline_mode<synchronous>, transform_indices = @transform_1, window_bounds = array<i64: 27, 512>}, {pipeline_mode = #tpu.pipeline_mode<synchronous>, transform_indices = @transform_2, window_bounds = array<i64: 8, 216>}, {pipeline_mode = #tpu.pipeline_mode<synchronous>, transform_indices = @transform_3, window_bounds = array<i64: 8, 1>}, {pipeline_mode = #tpu.pipeline_mode<synchronous>, transform_indices = @transform_4, window_bounds = array<i64: 8, 224>}, {pipeline_mode = #tpu.pipeline_mode<synchronous>, transform_indices = @transform_5, window_bounds = array<i64: 8, 1>}, {transform_indices = @transform_6, window_bounds = array<i64: 1, 8, 512>}]} {
    %c0 = arith.constant 0 : index
    %c0_0 = arith.constant 0 : index
    %c0_1 = arith.constant 0 : index
    %0 = vector.load %arg1[%c0, %c0_0, %c0_1] : memref<1x8x512xf32, #tpu.memory_space<vmem>>, vector<1x8x512xf32>
    %1 = vector.shape_cast %0 : vector<1x8x512xf32> to vector<8x512xf32>
    %c73_i32 = arith.constant 73 : i32
    %2 = tpu.dynamic_rotate %1 by %c73_i32 dim 1 : vector<8x512xf32>, i32 -> vector<8x512xf32>
    %c0_2 = arith.constant 0 : index
    %c0_3 = arith.constant 0 : index
    %3 = vector.load %arg2[%c0_2, %c0_3] : memref<27x512xf32, #tpu.memory_space<vmem>>, vector<1x512xf32>
    %4 = vector.broadcast %3 : vector<1x512xf32> to vector<8x512xf32>
    %5 = arith.mulf %2, %4 : vector<8x512xf32>
    %c72_i32 = arith.constant 72 : i32
    %6 = tpu.dynamic_rotate %1 by %c72_i32 dim 1 : vector<8x512xf32>, i32 -> vector<8x512xf32>
    %c1 = arith.constant 1 : index
    %c0_4 = arith.constant 0 : index
    %7 = vector.load %arg2[%c1, %c0_4] : memref<27x512xf32, #tpu.memory_space<vmem>>, vector<1x512xf32>
    %8 = vector.broadcast %7 : vector<1x512xf32> to vector<8x512xf32>
    %9 = arith.mulf %6, %8 : vector<8x512xf32>
    %c71_i32 = arith.constant 71 : i32
    %10 = tpu.dynamic_rotate %1 by %c71_i32 dim 1 : vector<8x512xf32>, i32 -> vector<8x512xf32>
    %c2 = arith.constant 2 : index
    %c0_5 = arith.constant 0 : index
    %11 = vector.load %arg2[%c2, %c0_5] : memref<27x512xf32, #tpu.memory_space<vmem>>, vector<1x512xf32>
    %12 = vector.broadcast %11 : vector<1x512xf32> to vector<8x512xf32>
    %13 = arith.mulf %10, %12 : vector<8x512xf32>
    %c65_i32 = arith.constant 65 : i32
    %14 = tpu.dynamic_rotate %1 by %c65_i32 dim 1 : vector<8x512xf32>, i32 -> vector<8x512xf32>
    %c3 = arith.constant 3 : index
    %c0_6 = arith.constant 0 : index
    %15 = vector.load %arg2[%c3, %c0_6] : memref<27x512xf32, #tpu.memory_space<vmem>>, vector<1x512xf32>
    %16 = vector.broadcast %15 : vector<1x512xf32> to vector<8x512xf32>
    %17 = arith.mulf %14, %16 : vector<8x512xf32>
    %c64_i32 = arith.constant 64 : i32
    %18 = tpu.dynamic_rotate %1 by %c64_i32 dim 1 : vector<8x512xf32>, i32 -> vector<8x512xf32>
    %c4 = arith.constant 4 : index
    %c0_7 = arith.constant 0 : index
    %19 = vector.load %arg2[%c4, %c0_7] : memref<27x512xf32, #tpu.memory_space<vmem>>, vector<1x512xf32>
    %20 = vector.broadcast %19 : vector<1x512xf32> to vector<8x512xf32>
    %21 = arith.mulf %18, %20 : vector<8x512xf32>
    %c63_i32 = arith.constant 63 : i32
    %22 = tpu.dynamic_rotate %1 by %c63_i32 dim 1 : vector<8x512xf32>, i32 -> vector<8x512xf32>
    %c5 = arith.constant 5 : index
    %c0_8 = arith.constant 0 : index
    %23 = vector.load %arg2[%c5, %c0_8] : memref<27x512xf32, #tpu.memory_space<vmem>>, vector<1x512xf32>
    %24 = vector.broadcast %23 : vector<1x512xf32> to vector<8x512xf32>
    %25 = arith.mulf %22, %24 : vector<8x512xf32>
    %c57_i32 = arith.constant 57 : i32
    %26 = tpu.dynamic_rotate %1 by %c57_i32 dim 1 : vector<8x512xf32>, i32 -> vector<8x512xf32>
    %c6 = arith.constant 6 : index
    %c0_9 = arith.constant 0 : index
    %27 = vector.load %arg2[%c6, %c0_9] : memref<27x512xf32, #tpu.memory_space<vmem>>, vector<1x512xf32>
    %28 = vector.broadcast %27 : vector<1x512xf32> to vector<8x512xf32>
    %29 = arith.mulf %26, %28 : vector<8x512xf32>
    %c56_i32 = arith.constant 56 : i32
    %30 = tpu.dynamic_rotate %1 by %c56_i32 dim 1 : vector<8x512xf32>, i32 -> vector<8x512xf32>
    %c7 = arith.constant 7 : index
    %c0_10 = arith.constant 0 : index
    %31 = vector.load %arg2[%c7, %c0_10] : memref<27x512xf32, #tpu.memory_space<vmem>>, vector<1x512xf32>
    %32 = vector.broadcast %31 : vector<1x512xf32> to vector<8x512xf32>
    %33 = arith.mulf %30, %32 : vector<8x512xf32>
    %c55_i32 = arith.constant 55 : i32
    %34 = tpu.dynamic_rotate %1 by %c55_i32 dim 1 : vector<8x512xf32>, i32 -> vector<8x512xf32>
    %c8 = arith.constant 8 : index
    %c0_11 = arith.constant 0 : index
    %35 = vector.load %arg2[%c8, %c0_11] : memref<27x512xf32, #tpu.memory_space<vmem>>, vector<1x512xf32>
    %36 = vector.broadcast %35 : vector<1x512xf32> to vector<8x512xf32>
    %37 = arith.mulf %34, %36 : vector<8x512xf32>
    %c9_i32 = arith.constant 9 : i32
    %38 = tpu.dynamic_rotate %1 by %c9_i32 dim 1 : vector<8x512xf32>, i32 -> vector<8x512xf32>
    %c9 = arith.constant 9 : index
    %c0_12 = arith.constant 0 : index
    %39 = vector.load %arg2[%c9, %c0_12] : memref<27x512xf32, #tpu.memory_space<vmem>>, vector<1x512xf32>
    %40 = vector.broadcast %39 : vector<1x512xf32> to vector<8x512xf32>
    %41 = arith.mulf %38, %40 : vector<8x512xf32>
    %c8_i32 = arith.constant 8 : i32
    %42 = tpu.dynamic_rotate %1 by %c8_i32 dim 1 : vector<8x512xf32>, i32 -> vector<8x512xf32>
    %c10 = arith.constant 10 : index
    %c0_13 = arith.constant 0 : index
    %43 = vector.load %arg2[%c10, %c0_13] : memref<27x512xf32, #tpu.memory_space<vmem>>, vector<1x512xf32>
    %44 = vector.broadcast %43 : vector<1x512xf32> to vector<8x512xf32>
    %45 = arith.mulf %42, %44 : vector<8x512xf32>
    %c7_i32 = arith.constant 7 : i32
    %46 = tpu.dynamic_rotate %1 by %c7_i32 dim 1 : vector<8x512xf32>, i32 -> vector<8x512xf32>
    %c11 = arith.constant 11 : index
    %c0_14 = arith.constant 0 : index
    %47 = vector.load %arg2[%c11, %c0_14] : memref<27x512xf32, #tpu.memory_space<vmem>>, vector<1x512xf32>
    %48 = vector.broadcast %47 : vector<1x512xf32> to vector<8x512xf32>
    %49 = arith.mulf %46, %48 : vector<8x512xf32>
    %c1_i32 = arith.constant 1 : i32
    %50 = tpu.dynamic_rotate %1 by %c1_i32 dim 1 : vector<8x512xf32>, i32 -> vector<8x512xf32>
    %c12 = arith.constant 12 : index
    %c0_15 = arith.constant 0 : index
    %51 = vector.load %arg2[%c12, %c0_15] : memref<27x512xf32, #tpu.memory_space<vmem>>, vector<1x512xf32>
    %52 = vector.broadcast %51 : vector<1x512xf32> to vector<8x512xf32>
    %53 = arith.mulf %50, %52 : vector<8x512xf32>
    %c511_i32 = arith.constant 511 : i32
    %54 = tpu.dynamic_rotate %1 by %c511_i32 dim 1 : vector<8x512xf32>, i32 -> vector<8x512xf32>
    %c14 = arith.constant 14 : index
    %c0_16 = arith.constant 0 : index
    %55 = vector.load %arg2[%c14, %c0_16] : memref<27x512xf32, #tpu.memory_space<vmem>>, vector<1x512xf32>
    %56 = vector.broadcast %55 : vector<1x512xf32> to vector<8x512xf32>
    %57 = arith.mulf %54, %56 : vector<8x512xf32>
    %c505_i32 = arith.constant 505 : i32
    %58 = tpu.dynamic_rotate %1 by %c505_i32 dim 1 : vector<8x512xf32>, i32 -> vector<8x512xf32>
    %c15 = arith.constant 15 : index
    %c0_17 = arith.constant 0 : index
    %59 = vector.load %arg2[%c15, %c0_17] : memref<27x512xf32, #tpu.memory_space<vmem>>, vector<1x512xf32>
    %60 = vector.broadcast %59 : vector<1x512xf32> to vector<8x512xf32>
    %61 = arith.mulf %58, %60 : vector<8x512xf32>
    %c504_i32 = arith.constant 504 : i32
    %62 = tpu.dynamic_rotate %1 by %c504_i32 dim 1 : vector<8x512xf32>, i32 -> vector<8x512xf32>
    %c16 = arith.constant 16 : index
    %c0_18 = arith.constant 0 : index
    %63 = vector.load %arg2[%c16, %c0_18] : memref<27x512xf32, #tpu.memory_space<vmem>>, vector<1x512xf32>
    %64 = vector.broadcast %63 : vector<1x512xf32> to vector<8x512xf32>
    %65 = arith.mulf %62, %64 : vector<8x512xf32>
    %c503_i32 = arith.constant 503 : i32
    %66 = tpu.dynamic_rotate %1 by %c503_i32 dim 1 : vector<8x512xf32>, i32 -> vector<8x512xf32>
    %c17 = arith.constant 17 : index
    %c0_19 = arith.constant 0 : index
    %67 = vector.load %arg2[%c17, %c0_19] : memref<27x512xf32, #tpu.memory_space<vmem>>, vector<1x512xf32>
    %68 = vector.broadcast %67 : vector<1x512xf32> to vector<8x512xf32>
    %69 = arith.mulf %66, %68 : vector<8x512xf32>
    %c457_i32 = arith.constant 457 : i32
    %70 = tpu.dynamic_rotate %1 by %c457_i32 dim 1 : vector<8x512xf32>, i32 -> vector<8x512xf32>
    %c18 = arith.constant 18 : index
    %c0_20 = arith.constant 0 : index
    %71 = vector.load %arg2[%c18, %c0_20] : memref<27x512xf32, #tpu.memory_space<vmem>>, vector<1x512xf32>
    %72 = vector.broadcast %71 : vector<1x512xf32> to vector<8x512xf32>
    %73 = arith.mulf %70, %72 : vector<8x512xf32>
    %c456_i32 = arith.constant 456 : i32
    %74 = tpu.dynamic_rotate %1 by %c456_i32 dim 1 : vector<8x512xf32>, i32 -> vector<8x512xf32>
    %c19 = arith.constant 19 : index
    %c0_21 = arith.constant 0 : index
    %75 = vector.load %arg2[%c19, %c0_21] : memref<27x512xf32, #tpu.memory_space<vmem>>, vector<1x512xf32>
    %76 = vector.broadcast %75 : vector<1x512xf32> to vector<8x512xf32>
    %77 = arith.mulf %74, %76 : vector<8x512xf32>
    %c455_i32 = arith.constant 455 : i32
    %78 = tpu.dynamic_rotate %1 by %c455_i32 dim 1 : vector<8x512xf32>, i32 -> vector<8x512xf32>
    %c20 = arith.constant 20 : index
    %c0_22 = arith.constant 0 : index
    %79 = vector.load %arg2[%c20, %c0_22] : memref<27x512xf32, #tpu.memory_space<vmem>>, vector<1x512xf32>
    %80 = vector.broadcast %79 : vector<1x512xf32> to vector<8x512xf32>
    %81 = arith.mulf %78, %80 : vector<8x512xf32>
    %c449_i32 = arith.constant 449 : i32
    %82 = tpu.dynamic_rotate %1 by %c449_i32 dim 1 : vector<8x512xf32>, i32 -> vector<8x512xf32>
    %c21 = arith.constant 21 : index
    %c0_23 = arith.constant 0 : index
    %83 = vector.load %arg2[%c21, %c0_23] : memref<27x512xf32, #tpu.memory_space<vmem>>, vector<1x512xf32>
    %84 = vector.broadcast %83 : vector<1x512xf32> to vector<8x512xf32>
    %85 = arith.mulf %82, %84 : vector<8x512xf32>
    %c448_i32 = arith.constant 448 : i32
    %86 = tpu.dynamic_rotate %1 by %c448_i32 dim 1 : vector<8x512xf32>, i32 -> vector<8x512xf32>
    %c22 = arith.constant 22 : index
    %c0_24 = arith.constant 0 : index
    %87 = vector.load %arg2[%c22, %c0_24] : memref<27x512xf32, #tpu.memory_space<vmem>>, vector<1x512xf32>
    %88 = vector.broadcast %87 : vector<1x512xf32> to vector<8x512xf32>
    %89 = arith.mulf %86, %88 : vector<8x512xf32>
    %c447_i32 = arith.constant 447 : i32
    %90 = tpu.dynamic_rotate %1 by %c447_i32 dim 1 : vector<8x512xf32>, i32 -> vector<8x512xf32>
    %c23 = arith.constant 23 : index
    %c0_25 = arith.constant 0 : index
    %91 = vector.load %arg2[%c23, %c0_25] : memref<27x512xf32, #tpu.memory_space<vmem>>, vector<1x512xf32>
    %92 = vector.broadcast %91 : vector<1x512xf32> to vector<8x512xf32>
    %93 = arith.mulf %90, %92 : vector<8x512xf32>
    %c441_i32 = arith.constant 441 : i32
    %94 = tpu.dynamic_rotate %1 by %c441_i32 dim 1 : vector<8x512xf32>, i32 -> vector<8x512xf32>
    %c24 = arith.constant 24 : index
    %c0_26 = arith.constant 0 : index
    %95 = vector.load %arg2[%c24, %c0_26] : memref<27x512xf32, #tpu.memory_space<vmem>>, vector<1x512xf32>
    %96 = vector.broadcast %95 : vector<1x512xf32> to vector<8x512xf32>
    %97 = arith.mulf %94, %96 : vector<8x512xf32>
    %c440_i32 = arith.constant 440 : i32
    %98 = tpu.dynamic_rotate %1 by %c440_i32 dim 1 : vector<8x512xf32>, i32 -> vector<8x512xf32>
    %c25 = arith.constant 25 : index
    %c0_27 = arith.constant 0 : index
    %99 = vector.load %arg2[%c25, %c0_27] : memref<27x512xf32, #tpu.memory_space<vmem>>, vector<1x512xf32>
    %100 = vector.broadcast %99 : vector<1x512xf32> to vector<8x512xf32>
    %101 = arith.mulf %98, %100 : vector<8x512xf32>
    %c439_i32 = arith.constant 439 : i32
    %102 = tpu.dynamic_rotate %1 by %c439_i32 dim 1 : vector<8x512xf32>, i32 -> vector<8x512xf32>
    %c26 = arith.constant 26 : index
    %c0_28 = arith.constant 0 : index
    %103 = vector.load %arg2[%c26, %c0_28] : memref<27x512xf32, #tpu.memory_space<vmem>>, vector<1x512xf32>
    %104 = vector.broadcast %103 : vector<1x512xf32> to vector<8x512xf32>
    %105 = arith.mulf %102, %104 : vector<8x512xf32>
    %106 = tpu.concatenate %5, %9, %13, %17, %21, %25, %29, %33, %37, %41, %45, %49, %53, %1, %57, %61 in 0 : vector<8x512xf32>, vector<8x512xf32>, vector<8x512xf32>, vector<8x512xf32>, vector<8x512xf32>, vector<8x512xf32>, vector<8x512xf32>, vector<8x512xf32>, vector<8x512xf32>, vector<8x512xf32>, vector<8x512xf32>, vector<8x512xf32>, vector<8x512xf32>, vector<8x512xf32>, vector<8x512xf32>, vector<8x512xf32> -> vector<128x512xf32>
    %107 = tpu.concatenate %65, %69, %73, %77, %81, %85, %89, %93, %97, %101, %105 in 0 : vector<8x512xf32>, vector<8x512xf32>, vector<8x512xf32>, vector<8x512xf32>, vector<8x512xf32>, vector<8x512xf32>, vector<8x512xf32>, vector<8x512xf32>, vector<8x512xf32>, vector<8x512xf32>, vector<8x512xf32> -> vector<88x512xf32>
    %108 = tpu.concatenate %106, %107 in 0 : vector<128x512xf32>, vector<88x512xf32> -> vector<216x512xf32>
    %109 = arith.truncf %108 : vector<216x512xf32> to vector<216x512xbf16>
    %c0_29 = arith.constant 0 : index
    %c0_30 = arith.constant 0 : index
    %110 = vector.load %arg3[%c0_29, %c0_30] : memref<8x216xbf16, #tpu.memory_space<vmem>>, vector<8x216xbf16>
    %cst = arith.constant dense<0.000000e+00> : vector<8x512xf32>
    %111 = tpu.matmul %110, %109, %cst {dimension_numbers = #tpu.dot_dimension_numbers<[1], [0], [0], [1], [0, 0, 1, 1], [], []>} : vector<8x216xbf16>, vector<216x512xbf16>, vector<8x512xf32> -> vector<8x512xf32>
    %c0_31 = arith.constant 0 : index
    %c0_32 = arith.constant 0 : index
    %112 = vector.load %arg4[%c0_31, %c0_32] : memref<8x1xf32, #tpu.memory_space<vmem>>, vector<8x1xf32>
    %113 = vector.broadcast %112 : vector<8x1xf32> to vector<8x512xf32>
    %114 = arith.addf %111, %113 : vector<8x512xf32>
    %cst_33 = arith.constant 0.000000e+00 : f32
    %115 = vector.broadcast %cst_33 : f32 to vector<8x512xf32>
    %116 = arith.maximumf %114, %115 : vector<8x512xf32>
    %c73_i32_34 = arith.constant 73 : i32
    %117 = tpu.dynamic_rotate %116 by %c73_i32_34 dim 1 : vector<8x512xf32>, i32 -> vector<8x512xf32>
    %c0_35 = arith.constant 0 : index
    %c0_36 = arith.constant 0 : index
    %118 = vector.load %arg2[%c0_35, %c0_36] : memref<27x512xf32, #tpu.memory_space<vmem>>, vector<1x512xf32>
    %119 = vector.broadcast %118 : vector<1x512xf32> to vector<8x512xf32>
    %120 = arith.mulf %117, %119 : vector<8x512xf32>
    %c72_i32_37 = arith.constant 72 : i32
    %121 = tpu.dynamic_rotate %116 by %c72_i32_37 dim 1 : vector<8x512xf32>, i32 -> vector<8x512xf32>
    %c1_38 = arith.constant 1 : index
    %c0_39 = arith.constant 0 : index
    %122 = vector.load %arg2[%c1_38, %c0_39] : memref<27x512xf32, #tpu.memory_space<vmem>>, vector<1x512xf32>
    %123 = vector.broadcast %122 : vector<1x512xf32> to vector<8x512xf32>
    %124 = arith.mulf %121, %123 : vector<8x512xf32>
    %c71_i32_40 = arith.constant 71 : i32
    %125 = tpu.dynamic_rotate %116 by %c71_i32_40 dim 1 : vector<8x512xf32>, i32 -> vector<8x512xf32>
    %c2_41 = arith.constant 2 : index
    %c0_42 = arith.constant 0 : index
    %126 = vector.load %arg2[%c2_41, %c0_42] : memref<27x512xf32, #tpu.memory_space<vmem>>, vector<1x512xf32>
    %127 = vector.broadcast %126 : vector<1x512xf32> to vector<8x512xf32>
    %128 = arith.mulf %125, %127 : vector<8x512xf32>
    %c65_i32_43 = arith.constant 65 : i32
    %129 = tpu.dynamic_rotate %116 by %c65_i32_43 dim 1 : vector<8x512xf32>, i32 -> vector<8x512xf32>
    %c3_44 = arith.constant 3 : index
    %c0_45 = arith.constant 0 : index
    %130 = vector.load %arg2[%c3_44, %c0_45] : memref<27x512xf32, #tpu.memory_space<vmem>>, vector<1x512xf32>
    %131 = vector.broadcast %130 : vector<1x512xf32> to vector<8x512xf32>
    %132 = arith.mulf %129, %131 : vector<8x512xf32>
    %c64_i32_46 = arith.constant 64 : i32
    %133 = tpu.dynamic_rotate %116 by %c64_i32_46 dim 1 : vector<8x512xf32>, i32 -> vector<8x512xf32>
    %c4_47 = arith.constant 4 : index
    %c0_48 = arith.constant 0 : index
    %134 = vector.load %arg2[%c4_47, %c0_48] : memref<27x512xf32, #tpu.memory_space<vmem>>, vector<1x512xf32>
    %135 = vector.broadcast %134 : vector<1x512xf32> to vector<8x512xf32>
    %136 = arith.mulf %133, %135 : vector<8x512xf32>
    %c63_i32_49 = arith.constant 63 : i32
    %137 = tpu.dynamic_rotate %116 by %c63_i32_49 dim 1 : vector<8x512xf32>, i32 -> vector<8x512xf32>
    %c5_50 = arith.constant 5 : index
    %c0_51 = arith.constant 0 : index
    %138 = vector.load %arg2[%c5_50, %c0_51] : memref<27x512xf32, #tpu.memory_space<vmem>>, vector<1x512xf32>
    %139 = vector.broadcast %138 : vector<1x512xf32> to vector<8x512xf32>
    %140 = arith.mulf %137, %139 : vector<8x512xf32>
    %c57_i32_52 = arith.constant 57 : i32
    %141 = tpu.dynamic_rotate %116 by %c57_i32_52 dim 1 : vector<8x512xf32>, i32 -> vector<8x512xf32>
    %c6_53 = arith.constant 6 : index
    %c0_54 = arith.constant 0 : index
    %142 = vector.load %arg2[%c6_53, %c0_54] : memref<27x512xf32, #tpu.memory_space<vmem>>, vector<1x512xf32>
    %143 = vector.broadcast %142 : vector<1x512xf32> to vector<8x512xf32>
    %144 = arith.mulf %141, %143 : vector<8x512xf32>
    %c56_i32_55 = arith.constant 56 : i32
    %145 = tpu.dynamic_rotate %116 by %c56_i32_55 dim 1 : vector<8x512xf32>, i32 -> vector<8x512xf32>
    %c7_56 = arith.constant 7 : index
    %c0_57 = arith.constant 0 : index
    %146 = vector.load %arg2[%c7_56, %c0_57] : memref<27x512xf32, #tpu.memory_space<vmem>>, vector<1x512xf32>
    %147 = vector.broadcast %146 : vector<1x512xf32> to vector<8x512xf32>
    %148 = arith.mulf %145, %147 : vector<8x512xf32>
    %c55_i32_58 = arith.constant 55 : i32
    %149 = tpu.dynamic_rotate %116 by %c55_i32_58 dim 1 : vector<8x512xf32>, i32 -> vector<8x512xf32>
    %c8_59 = arith.constant 8 : index
    %c0_60 = arith.constant 0 : index
    %150 = vector.load %arg2[%c8_59, %c0_60] : memref<27x512xf32, #tpu.memory_space<vmem>>, vector<1x512xf32>
    %151 = vector.broadcast %150 : vector<1x512xf32> to vector<8x512xf32>
    %152 = arith.mulf %149, %151 : vector<8x512xf32>
    %c9_i32_61 = arith.constant 9 : i32
    %153 = tpu.dynamic_rotate %116 by %c9_i32_61 dim 1 : vector<8x512xf32>, i32 -> vector<8x512xf32>
    %c9_62 = arith.constant 9 : index
    %c0_63 = arith.constant 0 : index
    %154 = vector.load %arg2[%c9_62, %c0_63] : memref<27x512xf32, #tpu.memory_space<vmem>>, vector<1x512xf32>
    %155 = vector.broadcast %154 : vector<1x512xf32> to vector<8x512xf32>
    %156 = arith.mulf %153, %155 : vector<8x512xf32>
    %c8_i32_64 = arith.constant 8 : i32
    %157 = tpu.dynamic_rotate %116 by %c8_i32_64 dim 1 : vector<8x512xf32>, i32 -> vector<8x512xf32>
    %c10_65 = arith.constant 10 : index
    %c0_66 = arith.constant 0 : index
    %158 = vector.load %arg2[%c10_65, %c0_66] : memref<27x512xf32, #tpu.memory_space<vmem>>, vector<1x512xf32>
    %159 = vector.broadcast %158 : vector<1x512xf32> to vector<8x512xf32>
    %160 = arith.mulf %157, %159 : vector<8x512xf32>
    %c7_i32_67 = arith.constant 7 : i32
    %161 = tpu.dynamic_rotate %116 by %c7_i32_67 dim 1 : vector<8x512xf32>, i32 -> vector<8x512xf32>
    %c11_68 = arith.constant 11 : index
    %c0_69 = arith.constant 0 : index
    %162 = vector.load %arg2[%c11_68, %c0_69] : memref<27x512xf32, #tpu.memory_space<vmem>>, vector<1x512xf32>
    %163 = vector.broadcast %162 : vector<1x512xf32> to vector<8x512xf32>
    %164 = arith.mulf %161, %163 : vector<8x512xf32>
    %c1_i32_70 = arith.constant 1 : i32
    %165 = tpu.dynamic_rotate %116 by %c1_i32_70 dim 1 : vector<8x512xf32>, i32 -> vector<8x512xf32>
    %c12_71 = arith.constant 12 : index
    %c0_72 = arith.constant 0 : index
    %166 = vector.load %arg2[%c12_71, %c0_72] : memref<27x512xf32, #tpu.memory_space<vmem>>, vector<1x512xf32>
    %167 = vector.broadcast %166 : vector<1x512xf32> to vector<8x512xf32>
    %168 = arith.mulf %165, %167 : vector<8x512xf32>
    %c511_i32_73 = arith.constant 511 : i32
    %169 = tpu.dynamic_rotate %116 by %c511_i32_73 dim 1 : vector<8x512xf32>, i32 -> vector<8x512xf32>
    %c14_74 = arith.constant 14 : index
    %c0_75 = arith.constant 0 : index
    %170 = vector.load %arg2[%c14_74, %c0_75] : memref<27x512xf32, #tpu.memory_space<vmem>>, vector<1x512xf32>
    %171 = vector.broadcast %170 : vector<1x512xf32> to vector<8x512xf32>
    %172 = arith.mulf %169, %171 : vector<8x512xf32>
    %c505_i32_76 = arith.constant 505 : i32
    %173 = tpu.dynamic_rotate %116 by %c505_i32_76 dim 1 : vector<8x512xf32>, i32 -> vector<8x512xf32>
    %c15_77 = arith.constant 15 : index
    %c0_78 = arith.constant 0 : index
    %174 = vector.load %arg2[%c15_77, %c0_78] : memref<27x512xf32, #tpu.memory_space<vmem>>, vector<1x512xf32>
    %175 = vector.broadcast %174 : vector<1x512xf32> to vector<8x512xf32>
    %176 = arith.mulf %173, %175 : vector<8x512xf32>
    %c504_i32_79 = arith.constant 504 : i32
    %177 = tpu.dynamic_rotate %116 by %c504_i32_79 dim 1 : vector<8x512xf32>, i32 -> vector<8x512xf32>
    %c16_80 = arith.constant 16 : index
    %c0_81 = arith.constant 0 : index
    %178 = vector.load %arg2[%c16_80, %c0_81] : memref<27x512xf32, #tpu.memory_space<vmem>>, vector<1x512xf32>
    %179 = vector.broadcast %178 : vector<1x512xf32> to vector<8x512xf32>
    %180 = arith.mulf %177, %179 : vector<8x512xf32>
    %c503_i32_82 = arith.constant 503 : i32
    %181 = tpu.dynamic_rotate %116 by %c503_i32_82 dim 1 : vector<8x512xf32>, i32 -> vector<8x512xf32>
    %c17_83 = arith.constant 17 : index
    %c0_84 = arith.constant 0 : index
    %182 = vector.load %arg2[%c17_83, %c0_84] : memref<27x512xf32, #tpu.memory_space<vmem>>, vector<1x512xf32>
    %183 = vector.broadcast %182 : vector<1x512xf32> to vector<8x512xf32>
    %184 = arith.mulf %181, %183 : vector<8x512xf32>
    %c457_i32_85 = arith.constant 457 : i32
    %185 = tpu.dynamic_rotate %116 by %c457_i32_85 dim 1 : vector<8x512xf32>, i32 -> vector<8x512xf32>
    %c18_86 = arith.constant 18 : index
    %c0_87 = arith.constant 0 : index
    %186 = vector.load %arg2[%c18_86, %c0_87] : memref<27x512xf32, #tpu.memory_space<vmem>>, vector<1x512xf32>
    %187 = vector.broadcast %186 : vector<1x512xf32> to vector<8x512xf32>
    %188 = arith.mulf %185, %187 : vector<8x512xf32>
    %c456_i32_88 = arith.constant 456 : i32
    %189 = tpu.dynamic_rotate %116 by %c456_i32_88 dim 1 : vector<8x512xf32>, i32 -> vector<8x512xf32>
    %c19_89 = arith.constant 19 : index
    %c0_90 = arith.constant 0 : index
    %190 = vector.load %arg2[%c19_89, %c0_90] : memref<27x512xf32, #tpu.memory_space<vmem>>, vector<1x512xf32>
    %191 = vector.broadcast %190 : vector<1x512xf32> to vector<8x512xf32>
    %192 = arith.mulf %189, %191 : vector<8x512xf32>
    %c455_i32_91 = arith.constant 455 : i32
    %193 = tpu.dynamic_rotate %116 by %c455_i32_91 dim 1 : vector<8x512xf32>, i32 -> vector<8x512xf32>
    %c20_92 = arith.constant 20 : index
    %c0_93 = arith.constant 0 : index
    %194 = vector.load %arg2[%c20_92, %c0_93] : memref<27x512xf32, #tpu.memory_space<vmem>>, vector<1x512xf32>
    %195 = vector.broadcast %194 : vector<1x512xf32> to vector<8x512xf32>
    %196 = arith.mulf %193, %195 : vector<8x512xf32>
    %c449_i32_94 = arith.constant 449 : i32
    %197 = tpu.dynamic_rotate %116 by %c449_i32_94 dim 1 : vector<8x512xf32>, i32 -> vector<8x512xf32>
    %c21_95 = arith.constant 21 : index
    %c0_96 = arith.constant 0 : index
    %198 = vector.load %arg2[%c21_95, %c0_96] : memref<27x512xf32, #tpu.memory_space<vmem>>, vector<1x512xf32>
    %199 = vector.broadcast %198 : vector<1x512xf32> to vector<8x512xf32>
    %200 = arith.mulf %197, %199 : vector<8x512xf32>
    %c448_i32_97 = arith.constant 448 : i32
    %201 = tpu.dynamic_rotate %116 by %c448_i32_97 dim 1 : vector<8x512xf32>, i32 -> vector<8x512xf32>
    %c22_98 = arith.constant 22 : index
    %c0_99 = arith.constant 0 : index
    %202 = vector.load %arg2[%c22_98, %c0_99] : memref<27x512xf32, #tpu.memory_space<vmem>>, vector<1x512xf32>
    %203 = vector.broadcast %202 : vector<1x512xf32> to vector<8x512xf32>
    %204 = arith.mulf %201, %203 : vector<8x512xf32>
    %c447_i32_100 = arith.constant 447 : i32
    %205 = tpu.dynamic_rotate %116 by %c447_i32_100 dim 1 : vector<8x512xf32>, i32 -> vector<8x512xf32>
    %c23_101 = arith.constant 23 : index
    %c0_102 = arith.constant 0 : index
    %206 = vector.load %arg2[%c23_101, %c0_102] : memref<27x512xf32, #tpu.memory_space<vmem>>, vector<1x512xf32>
    %207 = vector.broadcast %206 : vector<1x512xf32> to vector<8x512xf32>
    %208 = arith.mulf %205, %207 : vector<8x512xf32>
    %c441_i32_103 = arith.constant 441 : i32
    %209 = tpu.dynamic_rotate %116 by %c441_i32_103 dim 1 : vector<8x512xf32>, i32 -> vector<8x512xf32>
    %c24_104 = arith.constant 24 : index
    %c0_105 = arith.constant 0 : index
    %210 = vector.load %arg2[%c24_104, %c0_105] : memref<27x512xf32, #tpu.memory_space<vmem>>, vector<1x512xf32>
    %211 = vector.broadcast %210 : vector<1x512xf32> to vector<8x512xf32>
    %212 = arith.mulf %209, %211 : vector<8x512xf32>
    %c440_i32_106 = arith.constant 440 : i32
    %213 = tpu.dynamic_rotate %116 by %c440_i32_106 dim 1 : vector<8x512xf32>, i32 -> vector<8x512xf32>
    %c25_107 = arith.constant 25 : index
    %c0_108 = arith.constant 0 : index
    %214 = vector.load %arg2[%c25_107, %c0_108] : memref<27x512xf32, #tpu.memory_space<vmem>>, vector<1x512xf32>
    %215 = vector.broadcast %214 : vector<1x512xf32> to vector<8x512xf32>
    %216 = arith.mulf %213, %215 : vector<8x512xf32>
    %c439_i32_109 = arith.constant 439 : i32
    %217 = tpu.dynamic_rotate %116 by %c439_i32_109 dim 1 : vector<8x512xf32>, i32 -> vector<8x512xf32>
    %c26_110 = arith.constant 26 : index
    %c0_111 = arith.constant 0 : index
    %218 = vector.load %arg2[%c26_110, %c0_111] : memref<27x512xf32, #tpu.memory_space<vmem>>, vector<1x512xf32>
    %219 = vector.broadcast %218 : vector<1x512xf32> to vector<8x512xf32>
    %220 = arith.mulf %217, %219 : vector<8x512xf32>
    %221 = tpu.concatenate %120, %124, %128, %132, %136, %140, %144, %148, %152, %156, %160, %164, %168, %116, %172, %176 in 0 : vector<8x512xf32>, vector<8x512xf32>, vector<8x512xf32>, vector<8x512xf32>, vector<8x512xf32>, vector<8x512xf32>, vector<8x512xf32>, vector<8x512xf32>, vector<8x512xf32>, vector<8x512xf32>, vector<8x512xf32>, vector<8x512xf32>, vector<8x512xf32>, vector<8x512xf32>, vector<8x512xf32>, vector<8x512xf32> -> vector<128x512xf32>
    %222 = tpu.concatenate %180, %184, %188, %192, %196, %200, %204, %208, %212, %216, %220, %1 in 0 : vector<8x512xf32>, vector<8x512xf32>, vector<8x512xf32>, vector<8x512xf32>, vector<8x512xf32>, vector<8x512xf32>, vector<8x512xf32>, vector<8x512xf32>, vector<8x512xf32>, vector<8x512xf32>, vector<8x512xf32>, vector<8x512xf32> -> vector<96x512xf32>
    %223 = tpu.concatenate %221, %222 in 0 : vector<128x512xf32>, vector<96x512xf32> -> vector<224x512xf32>
    %224 = arith.truncf %223 : vector<224x512xf32> to vector<224x512xbf16>
    %c0_112 = arith.constant 0 : index
    %c0_113 = arith.constant 0 : index
    %225 = vector.load %arg5[%c0_112, %c0_113] : memref<8x224xbf16, #tpu.memory_space<vmem>>, vector<8x224xbf16>
    %cst_114 = arith.constant dense<0.000000e+00> : vector<8x512xf32>
    %226 = tpu.matmul %225, %224, %cst_114 {dimension_numbers = #tpu.dot_dimension_numbers<[1], [0], [0], [1], [0, 0, 1, 1], [], []>} : vector<8x224xbf16>, vector<224x512xbf16>, vector<8x512xf32> -> vector<8x512xf32>
    %c0_115 = arith.constant 0 : index
    %c0_116 = arith.constant 0 : index
    %227 = vector.load %arg6[%c0_115, %c0_116] : memref<8x1xf32, #tpu.memory_space<vmem>>, vector<8x1xf32>
    %228 = vector.broadcast %227 : vector<8x1xf32> to vector<8x512xf32>
    %229 = arith.addf %226, %228 : vector<8x512xf32>
    %cst_117 = arith.constant 0.000000e+00 : f32
    %230 = vector.broadcast %cst_117 : f32 to vector<8x512xf32>
    %231 = arith.maximumf %229, %230 : vector<8x512xf32>
    %c0_118 = arith.constant 0 : index
    %c0_119 = arith.constant 0 : index
    %c0_120 = arith.constant 0 : index
    %232 = vector.load %arg7[%c0_118, %c0_119, %c0_120] : memref<1x8x512xf32, #tpu.memory_space<vmem>>, vector<1x8x512xf32>
    %233 = vector.shape_cast %232 : vector<1x8x512xf32> to vector<8x512xf32>
    %234 = vector.shape_cast %231 : vector<8x512xf32> to vector<1x8x512xf32>
    tpu.vector_store %arg7[%c0_118, %c0_119, %c0_120], %234 {strides = array<i32>} : memref<1x8x512xf32, #tpu.memory_space<vmem>>, vector<1x8x512xf32>,
    return
  }
  func.func @transform_0(%arg0: i32) -> (i32, i32, i32) {
    %c0_i32 = arith.constant 0 : i32
    %c0_i32_0 = arith.constant 0 : i32
    %c0_i32_1 = arith.constant 0 : i32
    return %arg0, %c0_i32, %c0_i32_0 : i32, i32, i32
  }
  func.func @transform_1(%arg0: i32) -> (i32, i32) {
    %c0_i32 = arith.constant 0 : i32
    %c0_i32_0 = arith.constant 0 : i32
    %c0_i32_1 = arith.constant 0 : i32
    return %c0_i32, %c0_i32_0 : i32, i32
  }
  func.func @transform_2(%arg0: i32) -> (i32, i32) {
    %c0_i32 = arith.constant 0 : i32
    %c0_i32_0 = arith.constant 0 : i32
    %c0_i32_1 = arith.constant 0 : i32
    return %c0_i32, %c0_i32_0 : i32, i32
  }
  func.func @transform_3(%arg0: i32) -> (i32, i32) {
    %c0_i32 = arith.constant 0 : i32
    %c0_i32_0 = arith.constant 0 : i32
    %c0_i32_1 = arith.constant 0 : i32
    return %c0_i32, %c0_i32_0 : i32, i32
  }
  func.func @transform_4(%arg0: i32) -> (i32, i32) {
    %c0_i32 = arith.constant 0 : i32
    %c0_i32_0 = arith.constant 0 : i32
    %c0_i32_1 = arith.constant 0 : i32
    return %c0_i32, %c0_i32_0 : i32, i32
  }
  func.func @transform_5(%arg0: i32) -> (i32, i32) {
    %c0_i32 = arith.constant 0 : i32
    %c0_i32_0 = arith.constant 0 : i32
    %c0_i32_1 = arith.constant 0 : i32
    return %c0_i32, %c0_i32_0 : i32, i32
  }
  func.func @transform_6(%arg0: i32) -> (i32, i32, i32) {
    %c0_i32 = arith.constant 0 : i32
    %c0_i32_0 = arith.constant 0 : i32
    %c0_i32_1 = arith.constant 0 : i32
    return %arg0, %c0_i32, %c0_i32_0 : i32, i32, i32
  }
}

</mosaic_0001>

<llo_original>
// kernel: tpu_custom_call.1
$region0: #{tpu_custom_call.1}
  #allocation0 [shape = 'u32[]', space=smem, size = 0x4, offset = 0x4, fixed_abs, tag = 'smem constant byte address 0x4 - core index']
  #allocation1 [shape = 'u32[144,128]{1,0:T(1,128)}', space=vmem, size = 0x12000, scoped, tag = 'internal scratch']
  %s0 = inlined_call_operand.hbm [shape: f32[2,8,512], index: 0, kind: input, shape index: {}]
  %s1 = inlined_call_operand.hbm [shape: f32[27,512], index: 1, kind: input, shape index: {}]
  %s2 = inlined_call_operand.vmem [shape: bf16[8,216], index: 2, kind: input, shape index: {}]
  %s3 = inlined_call_operand.vmem [shape: f32[8,1], index: 3, kind: input, shape index: {}]
  %s4 = inlined_call_operand.vmem [shape: bf16[8,224], index: 4, kind: input, shape index: {}]
  %s5 = inlined_call_operand.vmem [shape: f32[8,1], index: 5, kind: input, shape index: {}]
  %s6 = inlined_call_operand.hbm [shape: f32[2,8,512], index: 6, kind: output, shape index: {}]
  %s7 = sld [smem:[#allocation0]]
  $region65: #{tpu_custom_call.1} parent=0
    _
  %s9 = ssub.s32 1, %s7
  %s10 = scalar_select 0, %s9, %s7
  $region1: #{tpu_custom_call.1} parent=0
    #allocation2 [shape = 'u8[32768]{0}', space=vmem, size = 0x8000, scoped, tag = 'input window, operand 0']
    #allocation3 [shape = 's32[2]{0}', space=sflag, size = 0x8, scoped, tag = 'scoped memory for tpu_custom_call.1']
    #allocation4 [shape = 's32[2]{0}', space=sflag, size = 0x8, scoped, tag = 'scoped memory for tpu_custom_call.1']
    #allocation5 [shape = 'u8[65536]{0}', space=vmem, size = 0x10000, scoped, tag = 'input window, operand 1, single buffered']
    #allocation6 [shape = 's32[1]{0}', space=sflag, size = 0x4, scoped, tag = 'scoped memory for tpu_custom_call.1']
    #allocation7 [shape = 'u8[32768]{0}', space=vmem, size = 0x8000, scoped, tag = 'output window, operand 0']
    %11 = vsyncpa [#allocation3], 0
    %s12 = scalar_lea.sflag [#allocation3], 1
    %13 = vsyncpa %s12, 0
    %14 = vsyncpa [#allocation6], 0
    %15 = vsyncpa [#allocation4], 0
    %s16 = scalar_lea.sflag [#allocation4], 1
    %17 = vsyncpa %s16, 0
    loop: start=0, step=1, limit=4
    $region2: #{tpu_custom_call.1} parent=1 // loop_pre_header
      _
    $region3: #{tpu_custom_call.1} parent=1 // loop_header
      %s19 = sphi 0, %s23
      %p20 = scmp.ge.s32.totalorder %s19, 4
      %s29 = sphi 0, %s31
      %s32 = sphi 0, %s29
      %s33 = sphi 0, %s32
      %s49 = sphi 0, %s33
      %s53 = sphi 0, %s53
      %s55 = sphi 0, %s53
      %s56 = sphi 0, %s55
      %s70 = sphi 0, %s56
      %s74 = sphi 0, %s74
      %s76 = sphi 0, %s74
      %s77 = sphi 0, %s76
      %s91 = sphi 0, %s77
      %s95 = sphi 0, %s95
      %s97 = sphi 0, %s95
      %s98 = sphi 0, %s97
      %s112 = sphi 0, %s98
      %s116 = sphi 0, %s116
      %s118 = sphi 0, %s116
      %s119 = sphi 0, %s118
      %s133 = sphi 0, %s119
      %s137 = sphi 0, %s137
      %s139 = sphi 0, %s137
      %s140 = sphi 0, %s139
      %s154 = sphi 0, %s140
      %s160 = sphi 0, %s162
      %s163 = sphi 0, %s160
      %s164 = sphi 0, %s163
      %s180 = sphi 0, %s164
    $region4: #{tpu_custom_call.1} parent=1 // loop_header_branch
      %22 = sbr.rel (%p20) target = $region8
    $region5: #{tpu_custom_call.1} parent=1 // loop_body
      %s24 = ssub.s32 %s19, 1
      %s25 = ssub.s32 %s19, 2
      %s26 = sadd.s32 %s19, 1
      %s27 = ssub.s32 %s19, %s26
      %p28 = scmp.eq.s32.totalorder %s27, 0
      %s30 = sadd.s32 %s29, 1
      %s31 = scalar_select %p28, %s29, %s30
      %p34 = pneg %p28
      %p35 = scmp.eq.s32.totalorder %s19, 1
      %p36 = por %p34, %p35
      %p37 = scmp.ne.s32.totalorder %s29, %s32
      %p38 = scmp.eq.s32.totalorder %s19, 0
      %p39 = por %p37, %p38
      %p40 = scmp.ne.s32.totalorder %s29, %s32
      %p41 = scmp.eq.s32.totalorder %s24, 1
      %p42 = por %p40, %p41
      %p43 = scmp.ne.s32.totalorder %s32, %s33
      %p44 = scmp.eq.s32.totalorder %s24, 0
      %p45 = por %p43, %p44
      %p46 = scmp.ne.s32.totalorder %s32, %s33
      %p47 = scmp.eq.s32.totalorder %s25, 1
      %p48 = por %p46, %p47
      %p50 = scmp.ne.s32.totalorder %s33, %s49
      %p51 = scmp.eq.s32.totalorder %s25, 0
      %p52 = por %p50, %p51
      %s54 = sadd.s32 %s53, 1
      %p57 = scmp.eq.s32.totalorder %s19, 1
      %p58 = scmp.ne.s32.totalorder %s53, %s55
      %p59 = scmp.eq.s32.totalorder %s19, 0
      %p60 = por %p58, %p59
      %p61 = scmp.ne.s32.totalorder %s53, %s55
      %p62 = scmp.eq.s32.totalorder %s24, 1
      %p63 = por %p61, %p62
      %p64 = scmp.ne.s32.totalorder %s55, %s56
      %p65 = scmp.eq.s32.totalorder %s24, 0
      %p66 = por %p64, %p65
      %p67 = scmp.ne.s32.totalorder %s55, %s56
      %p68 = scmp.eq.s32.totalorder %s25, 1
      %p69 = por %p67, %p68
      %p71 = scmp.ne.s32.totalorder %s56, %s70
      %p72 = scmp.eq.s32.totalorder %s25, 0
      %p73 = por %p71, %p72
      %s75 = sadd.s32 %s74, 1
      %p78 = scmp.eq.s32.totalorder %s19, 1
      %p79 = scmp.ne.s32.totalorder %s74, %s76
      %p80 = scmp.eq.s32.totalorder %s19, 0
      %p81 = por %p79, %p80
      %p82 = scmp.ne.s32.totalorder %s74, %s76
      %p83 = scmp.eq.s32.totalorder %s24, 1
      %p84 = por %p82, %p83
      %p85 = scmp.ne.s32.totalorder %s76, %s77
      %p86 = scmp.eq.s32.totalorder %s24, 0
      %p87 = por %p85, %p86
      %p88 = scmp.ne.s32.totalorder %s76, %s77
      %p89 = scmp.eq.s32.totalorder %s25, 1
      %p90 = por %p88, %p89
      %p92 = scmp.ne.s32.totalorder %s77, %s91
      %p93 = scmp.eq.s32.totalorder %s25, 0
      %p94 = por %p92, %p93
      %s96 = sadd.s32 %s95, 1
      %p99 = scmp.eq.s32.totalorder %s19, 1
      %p100 = scmp.ne.s32.totalorder %s95, %s97
      %p101 = scmp.eq.s32.totalorder %s19, 0
      %p102 = por %p100, %p101
      %p103 = scmp.ne.s32.totalorder %s95, %s97
      %p104 = scmp.eq.s32.totalorder %s24, 1
      %p105 = por %p103, %p104
      %p106 = scmp.ne.s32.totalorder %s97, %s98
      %p107 = scmp.eq.s32.totalorder %s24, 0
      %p108 = por %p106, %p107
      %p109 = scmp.ne.s32.totalorder %s97, %s98
      %p110 = scmp.eq.s32.totalorder %s25, 1
      %p111 = por %p109, %p110
      %p113 = scmp.ne.s32.totalorder %s98, %s112
      %p114 = scmp.eq.s32.totalorder %s25, 0
      %p115 = por %p113, %p114
      %s117 = sadd.s32 %s116, 1
      %p120 = scmp.eq.s32.totalorder %s19, 1
      %p121 = scmp.ne.s32.totalorder %s116, %s118
      %p122 = scmp.eq.s32.totalorder %s19, 0
      %p123 = por %p121, %p122
      %p124 = scmp.ne.s32.totalorder %s116, %s118
      %p125 = scmp.eq.s32.totalorder %s24, 1
      %p126 = por %p124, %p125
      %p127 = scmp.ne.s32.totalorder %s118, %s119
      %p128 = scmp.eq.s32.totalorder %s24, 0
      %p129 = por %p127, %p128
      %p130 = scmp.ne.s32.totalorder %s118, %s119
      %p131 = scmp.eq.s32.totalorder %s25, 1
      %p132 = por %p130, %p131
      %p134 = scmp.ne.s32.totalorder %s119, %s133
      %p135 = scmp.eq.s32.totalorder %s25, 0
      %p136 = por %p134, %p135
      %s138 = sadd.s32 %s137, 1
      %p141 = scmp.eq.s32.totalorder %s19, 1
      %p142 = scmp.ne.s32.totalorder %s137, %s139
      %p143 = scmp.eq.s32.totalorder %s19, 0
      %p144 = por %p142, %p143
      %p145 = scmp.ne.s32.totalorder %s137, %s139
      %p146 = scmp.eq.s32.totalorder %s24, 1
      %p147 = por %p145, %p146
      %p148 = scmp.ne.s32.totalorder %s139, %s140
      %p149 = scmp.eq.s32.totalorder %s24, 0
      %p150 = por %p148, %p149
      %p151 = scmp.ne.s32.totalorder %s139, %s140
      %p152 = scmp.eq.s32.totalorder %s25, 1
      %p153 = por %p151, %p152
      %p155 = scmp.ne.s32.totalorder %s140, %s154
      %p156 = scmp.eq.s32.totalorder %s25, 0
      %p157 = por %p155, %p156
      %s158 = ssub.s32 %s19, %s26
      %p159 = scmp.eq.s32.totalorder %s158, 0
      %s161 = sadd.s32 %s160, 1
      %s162 = scalar_select %p159, %s160, %s161
      %p165 = pneg %p159
      %p166 = scmp.eq.s32.totalorder %s19, 1
      %p167 = por %p165, %p166
      %p168 = scmp.ne.s32.totalorder %s160, %s163
      %p169 = scmp.eq.s32.totalorder %s19, 0
      %p170 = por %p168, %p169
      %p171 = scmp.ne.s32.totalorder %s160, %s163
      %p172 = scmp.eq.s32.totalorder %s24, 1
      %p173 = por %p171, %p172
      %p174 = scmp.ne.s32.totalorder %s163, %s164
      %p175 = scmp.eq.s32.totalorder %s24, 0
      %p176 = por %p174, %p175
      %p177 = scmp.ne.s32.totalorder %s163, %s164
      %p178 = scmp.eq.s32.totalorder %s25, 1
      %p179 = por %p177, %p178
      %p181 = scmp.ne.s32.totalorder %s164, %s180
      %p182 = scmp.eq.s32.totalorder %s25, 0
      %p183 = por %p181, %p182
      %p184 = scmp.le.s32.totalorder 1, %s19
      %p185 = scmp.lt.s32.totalorder %s19, 3
      %p186 = pnand %p184, %p185
      %p187 = pneg %p186
      // Predicated region
      $region9: #{tpu_custom_call.1} parent=5 // pred_check
        _
      $region10: #{tpu_custom_call.1} parent=5 // pred_check_branch
        %189 = sbr.rel (%p186) target = $region12
      $region11: #{tpu_custom_call.1} parent=5 // pred_region
        %s190 = ssub.s32 %s19, 1
        // Predicated region
        $region13: #{tpu_custom_call.1} parent=11 // pred_check
          %p191 = pneg %p66
        $region14: #{tpu_custom_call.1} parent=11 // pred_check_branch
          %193 = sbr.rel (%p191) target = $region16
        $region15: #{tpu_custom_call.1} parent=11 // pred_region
          %s195 = ssub.s32 2048, 2048
          %196 = vsyncadd [#allocation6], %s195
          %s197 = sshll.u32 [#allocation5], 4
          %s198 = int_to_ptr.vmem [resolvable:$true] %s197
          %203 = dma.hbm_to_vmem [thread:$0]  %s1, 2048, %s198, [#allocation6], 512, 512, 32
        $region16: #{tpu_custom_call.1} parent=11 // pred_fallthru
          _
        // Predicated region
        $region17: #{tpu_custom_call.1} parent=11 // pred_check
          %p204 = pneg %p87
        $region18: #{tpu_custom_call.1} parent=11 // pred_check_branch
          %206 = sbr.rel (%p204) target = $region20
        $region19: #{tpu_custom_call.1} parent=11 // pred_region
          _
        $region20: #{tpu_custom_call.1} parent=11 // pred_fallthru
          _
        // Predicated region
        $region21: #{tpu_custom_call.1} parent=11 // pred_check
          %p207 = pneg %p108
        $region22: #{tpu_custom_call.1} parent=11 // pred_check_branch
          %209 = sbr.rel (%p207) target = $region24
        $region23: #{tpu_custom_call.1} parent=11 // pred_region
          _
        $region24: #{tpu_custom_call.1} parent=11 // pred_fallthru
          _
        // Predicated region
        $region25: #{tpu_custom_call.1} parent=11 // pred_check
          %p210 = pneg %p129
        $region26: #{tpu_custom_call.1} parent=11 // pred_check_branch
          %212 = sbr.rel (%p210) target = $region28
        $region27: #{tpu_custom_call.1} parent=11 // pred_region
          _
        $region28: #{tpu_custom_call.1} parent=11 // pred_fallthru
          _
        // Predicated region
        $region29: #{tpu_custom_call.1} parent=11 // pred_check
          %p213 = pneg %p150
        $region30: #{tpu_custom_call.1} parent=11 // pred_check_branch
          %215 = sbr.rel (%p213) target = $region32
        $region31: #{tpu_custom_call.1} parent=11 // pred_region
          _
        $region32: #{tpu_custom_call.1} parent=11 // pred_fallthru
          _
      $region12: #{tpu_custom_call.1} parent=5 // pred_fallthru
        _
      %p216 = scmp.lt.s32.totalorder %s19, 2
      // Predicated region
      $region33: #{tpu_custom_call.1} parent=5 // pred_check
        %p217 = pneg %p216
      $region34: #{tpu_custom_call.1} parent=5 // pred_check_branch
        %219 = sbr.rel (%p217) target = $region36
      $region35: #{tpu_custom_call.1} parent=5 // pred_region
        // Predicated region
        $region37: #{tpu_custom_call.1} parent=35 // pred_check
          %p220 = pneg %p39
        $region38: #{tpu_custom_call.1} parent=35 // pred_check_branch
          %222 = sbr.rel (%p220) target = $region40
        $region39: #{tpu_custom_call.1} parent=35 // pred_region
          %s223 = sand.u32 %s29, 1
          %s224 = scalar_lea.sflag [#allocation3], %s223
          %s225 = sand.u32 %s29, 1
          %s226 = smul.addr %s225, 32
          %s227 = scalar_lea.vmem [#allocation2], %s226
          %s229 = ssub.s32 512, 512
          %230 = vsyncadd %s224, %s229
          %s231 = smul.addr %s19, 4
          %s232 = smul.addr %s231, 128
          %s233 = scalar_lea.hbm %s0, %s232
          %s235 = sshll.u32 %s227, 4
          %s236 = int_to_ptr.vmem [resolvable:$true] %s235
          %238 = dma.hbm_to_vmem [thread:$0]  %s233, 512, %s236, %s224
        $region40: #{tpu_custom_call.1} parent=35 // pred_fallthru
          _
      $region36: #{tpu_custom_call.1} parent=5 // pred_fallthru
        _
      %p239 = scmp.le.s32.totalorder 1, %s19
      %p240 = scmp.lt.s32.totalorder %s19, 3
      %p241 = pnand %p239, %p240
      %p242 = pneg %p241
      // Predicated region
      $region41: #{tpu_custom_call.1} parent=5 // pred_check
        _
      $region42: #{tpu_custom_call.1} parent=5 // pred_check_branch
        %244 = sbr.rel (%p241) target = $region44
      $region43: #{tpu_custom_call.1} parent=5 // pred_region
        %s245 = ssub.s32 %s19, 1
        %s246 = sand.u32 %s32, 1
        %s247 = scalar_lea.sflag [#allocation3], %s246
        %s248 = sand.u32 %s32, 1
        %s249 = smul.addr %s248, 32
        %s250 = scalar_lea.vmem [#allocation2], %s249
        // Predicated region
        $region45: #{tpu_custom_call.1} parent=43 // pred_check
          %p251 = pneg %p45
        $region46: #{tpu_custom_call.1} parent=43 // pred_check_branch
          %253 = sbr.rel (%p251) target = $region48
        $region47: #{tpu_custom_call.1} parent=43 // pred_region
          %254 = dma.done %s247, 512
        $region48: #{tpu_custom_call.1} parent=43 // pred_fallthru
          _
        // Predicated region
        $region49: #{tpu_custom_call.1} parent=43 // pred_check
          %p255 = pneg %p66
        $region50: #{tpu_custom_call.1} parent=43 // pred_check_branch
          %257 = sbr.rel (%p255) target = $region52
        $region51: #{tpu_custom_call.1} parent=43 // pred_region
          %258 = dma.done [#allocation6], 2048
        $region52: #{tpu_custom_call.1} parent=43 // pred_fallthru
          _
        %s259 = sand.u32 %s32, 1
        %s260 = scalar_lea.sflag [#allocation3], %s259
        %s261 = sand.u32 %s32, 1
        %s262 = smul.addr %s261, 32
        %s263 = scalar_lea.vmem [#allocation2], %s262
        %p264 = pneg %p45
        %p265 = pneg %p42
        %p266 = pneg %p66
        %p267 = pneg %p63
        %p268 = pneg %p87
        %p269 = pneg %p84
        %p270 = pneg %p108
        %p271 = pneg %p105
        %p272 = pneg %p129
        %p273 = pneg %p126
        %p274 = pneg %p150
        %p275 = pneg %p147
        %p276 = pneg %p176
        %p277 = pneg %p173
        %s278 = sand.u32 %s163, 1
        %s279 = scalar_lea.sflag [#allocation4], %s278
        %s280 = sand.u32 %s163, 1
        %s281 = smul.addr %s280, 32
        %s282 = scalar_lea.vmem [#allocation7], %s281
        %v284 = vld [vmem:[%s250] sm:$0xff]
        %v285 = vld [vmem:[%s250 + $0x8] sm:$0xff]
        %v286 = vld [vmem:[%s250 + $0x10] sm:$0xff]
        %v287 = vld [vmem:[%s250 + $0x18] sm:$0xff]
        %288 = vrot.lane.b32.xlu0 %v284, 73
        %v289 = vpop.permute.xlu0 %288
        %290 = vrot.lane.b32.xlu0 %v285, 73
        %v291 = vpop.permute.xlu0 %290
        %292 = vrot.lane.b32.xlu0 %v286, 73
        %v293 = vpop.permute.xlu0 %292
        %294 = vrot.lane.b32.xlu0 %v287, 73
        %v295 = vpop.permute.xlu0 %294
        %v296 = vlaneseq
        %v297 = vand.u32 %v296, 127
        %vm298 = vcmp.lt.s32.totalorder %v297, 73
        %v299 = vsel %vm298, %v293, %v295
        %v300 = vsel %vm298, %v291, %v293
        %v301 = vsel %vm298, %v289, %v291
        %v302 = vsel %vm298, %v295, %v289
        %v303 = vld [vmem:[#allocation5] ss:$8 sm:$0xf]
        %v305 = vlaneseq
        %v306 = vshrl.u32 %v305, 7
        %v307 = vsub.s32 0, %v306
        %v308 = vrot.slane %v303, %v307
        %v309 = vlaneseq
        %v310 = vshrl.u32 %v309, 7
        %v311 = vsub.s32 1, %v310
        %v312 = vrot.slane %v303, %v311
        %v313 = vlaneseq
        %v314 = vshrl.u32 %v313, 7
        %v315 = vsub.s32 2, %v314
        %v316 = vrot.slane %v303, %v315
        %v317 = vlaneseq
        %v318 = vshrl.u32 %v317, 7
        %v319 = vsub.s32 3, %v318
        %v320 = vrot.slane %v303, %v319
        %v325 = vmul.f32 %v302, %v308
        %v326 = vmul.f32 %v301, %v312
        %v327 = vmul.f32 %v300, %v316
        %v328 = vmul.f32 %v299, %v320
        %329 = vrot.lane.b32.xlu0 %v284, 72
        %v330 = vpop.permute.xlu0 %329
        %331 = vrot.lane.b32.xlu0 %v285, 72
        %v332 = vpop.permute.xlu0 %331
        %333 = vrot.lane.b32.xlu0 %v286, 72
        %v334 = vpop.permute.xlu0 %333
        %335 = vrot.lane.b32.xlu0 %v287, 72
        %v336 = vpop.permute.xlu0 %335
        %vm337 = vcmp.lt.s32.totalorder %v297, 72
        %v338 = vsel %vm337, %v334, %v336
        %v339 = vsel %vm337, %v332, %v334
        %v340 = vsel %vm337, %v330, %v332
        %v341 = vsel %vm337, %v336, %v330
        %s342 = scalar_lea.vmem [#allocation5], 1
        %v343 = vld [vmem:[%s342] ss:$8 sm:$0xf]
        %v345 = vlaneseq
        %v346 = vshrl.u32 %v345, 7
        %v347 = vsub.s32 0, %v346
        %v348 = vrot.slane %v343, %v347
        %v349 = vlaneseq
        %v350 = vshrl.u32 %v349, 7
        %v351 = vsub.s32 1, %v350
        %v352 = vrot.slane %v343, %v351
        %v353 = vlaneseq
        %v354 = vshrl.u32 %v353, 7
        %v355 = vsub.s32 2, %v354
        %v356 = vrot.slane %v343, %v355
        %v357 = vlaneseq
        %v358 = vshrl.u32 %v357, 7
        %v359 = vsub.s32 3, %v358
        %v360 = vrot.slane %v343, %v359
        %v365 = vmul.f32 %v341, %v348
        %v366 = vmul.f32 %v340, %v352
        %v367 = vmul.f32 %v339, %v356
        %v368 = vmul.f32 %v338, %v360
        %369 = vrot.lane.b32.xlu0 %v284, 71
        %v370 = vpop.permute.xlu0 %369
        %371 = vrot.lane.b32.xlu0 %v285, 71
        %v372 = vpop.permute.xlu0 %371
        %373 = vrot.lane.b32.xlu0 %v286, 71
        %v374 = vpop.permute.xlu0 %373
        %375 = vrot.lane.b32.xlu0 %v287, 71
        %v376 = vpop.permute.xlu0 %375
        %vm377 = vcmp.lt.s32.totalorder %v297, 71
        %v378 = vsel %vm377, %v374, %v376
        %v379 = vsel %vm377, %v372, %v374
        %v380 = vsel %vm377, %v370, %v372
        %v381 = vsel %vm377, %v376, %v370
        %s382 = scalar_lea.vmem [#allocation5], 2
        %v383 = vld [vmem:[%s382] ss:$8 sm:$0xf]
        %v385 = vlaneseq
        %v386 = vshrl.u32 %v385, 7
        %v387 = vsub.s32 0, %v386
        %v388 = vrot.slane %v383, %v387
        %v389 = vlaneseq
        %v390 = vshrl.u32 %v389, 7
        %v391 = vsub.s32 1, %v390
        %v392 = vrot.slane %v383, %v391
        %v393 = vlaneseq
        %v394 = vshrl.u32 %v393, 7
        %v395 = vsub.s32 2, %v394
        %v396 = vrot.slane %v383, %v395
        %v397 = vlaneseq
        %v398 = vshrl.u32 %v397, 7
        %v399 = vsub.s32 3, %v398
        %v400 = vrot.slane %v383, %v399
        %v405 = vmul.f32 %v381, %v388
        %v406 = vmul.f32 %v380, %v392
        %v407 = vmul.f32 %v379, %v396
        %v408 = vmul.f32 %v378, %v400
        %409 = vrot.lane.b32.xlu0 %v284, 65
        %v410 = vpop.permute.xlu0 %409
        %411 = vrot.lane.b32.xlu0 %v285, 65
        %v412 = vpop.permute.xlu0 %411
        %413 = vrot.lane.b32.xlu0 %v286, 65
        %v414 = vpop.permute.xlu0 %413
        %415 = vrot.lane.b32.xlu0 %v287, 65
        %v416 = vpop.permute.xlu0 %415
        %vm417 = vcmp.lt.s32.totalorder %v297, 65
        %v418 = vsel %vm417, %v414, %v416
        %v419 = vsel %vm417, %v412, %v414
        %v420 = vsel %vm417, %v410, %v412
        %v421 = vsel %vm417, %v416, %v410
        %s422 = scalar_lea.vmem [#allocation5], 3
        %v423 = vld [vmem:[%s422] ss:$8 sm:$0xf]
        %v425 = vlaneseq
        %v426 = vshrl.u32 %v425, 7
        %v427 = vsub.s32 0, %v426
        %v428 = vrot.slane %v423, %v427
        %v429 = vlaneseq
        %v430 = vshrl.u32 %v429, 7
        %v431 = vsub.s32 1, %v430
        %v432 = vrot.slane %v423, %v431
        %v433 = vlaneseq
        %v434 = vshrl.u32 %v433, 7
        %v435 = vsub.s32 2, %v434
        %v436 = vrot.slane %v423, %v435
        %v437 = vlaneseq
        %v438 = vshrl.u32 %v437, 7
        %v439 = vsub.s32 3, %v438
        %v440 = vrot.slane %v423, %v439
        %v445 = vmul.f32 %v421, %v428
        %v446 = vmul.f32 %v420, %v432
        %v447 = vmul.f32 %v419, %v436
        %v448 = vmul.f32 %v418, %v440
        %449 = vrot.lane.b32.xlu0 %v284, 64
        %v450 = vpop.permute.xlu0 %449
        %451 = vrot.lane.b32.xlu0 %v285, 64
        %v452 = vpop.permute.xlu0 %451
        %453 = vrot.lane.b32.xlu0 %v286, 64
        %v454 = vpop.permute.xlu0 %453
        %455 = vrot.lane.b32.xlu0 %v287, 64
        %v456 = vpop.permute.xlu0 %455
        %vm457 = vcmp.lt.s32.totalorder %v297, 64
        %v458 = vsel %vm457, %v454, %v456
        %v459 = vsel %vm457, %v452, %v454
        %v460 = vsel %vm457, %v450, %v452
        %v461 = vsel %vm457, %v456, %v450
        %s462 = scalar_lea.vmem [#allocation5], 4
        %v463 = vld [vmem:[%s462] ss:$8 sm:$0xf]
        %v465 = vlaneseq
        %v466 = vshrl.u32 %v465, 7
        %v467 = vsub.s32 0, %v466
        %v468 = vrot.slane %v463, %v467
        %v469 = vlaneseq
        %v470 = vshrl.u32 %v469, 7
        %v471 = vsub.s32 1, %v470
        %v472 = vrot.slane %v463, %v471
        %v473 = vlaneseq
        %v474 = vshrl.u32 %v473, 7
        %v475 = vsub.s32 2, %v474
        %v476 = vrot.slane %v463, %v475
        %v477 = vlaneseq
        %v478 = vshrl.u32 %v477, 7
        %v479 = vsub.s32 3, %v478
        %v480 = vrot.slane %v463, %v479
        %v485 = vmul.f32 %v461, %v468
        %v486 = vmul.f32 %v460, %v472
        %v487 = vmul.f32 %v459, %v476
        %v488 = vmul.f32 %v458, %v480
        %489 = vrot.lane.b32.xlu0 %v284, 63
        %v490 = vpop.permute.xlu0 %489
        %491 = vrot.lane.b32.xlu0 %v285, 63
        %v492 = vpop.permute.xlu0 %491
        %493 = vrot.lane.b32.xlu0 %v286, 63
        %v494 = vpop.permute.xlu0 %493
        %495 = vrot.lane.b32.xlu0 %v287, 63
        %v496 = vpop.permute.xlu0 %495
        %vm497 = vcmp.lt.s32.totalorder %v297, 63
        %v498 = vsel %vm497, %v494, %v496
        %v499 = vsel %vm497, %v492, %v494
        %v500 = vsel %vm497, %v490, %v492
        %v501 = vsel %vm497, %v496, %v490
        %s502 = scalar_lea.vmem [#allocation5], 5
        %v503 = vld [vmem:[%s502] ss:$8 sm:$0xf]
        %v505 = vlaneseq
        %v506 = vshrl.u32 %v505, 7
        %v507 = vsub.s32 0, %v506
        %v508 = vrot.slane %v503, %v507
        %v509 = vlaneseq
        %v510 = vshrl.u32 %v509, 7
        %v511 = vsub.s32 1, %v510
        %v512 = vrot.slane %v503, %v511
        %v513 = vlaneseq
        %v514 = vshrl.u32 %v513, 7
        %v515 = vsub.s32 2, %v514
        %v516 = vrot.slane %v503, %v515
        %v517 = vlaneseq
        %v518 = vshrl.u32 %v517, 7
        %v519 = vsub.s32 3, %v518
        %v520 = vrot.slane %v503, %v519
        %v525 = vmul.f32 %v501, %v508
        %v526 = vmul.f32 %v500, %v512
        %v527 = vmul.f32 %v499, %v516
        %v528 = vmul.f32 %v498, %v520
        %529 = vrot.lane.b32.xlu0 %v284, 57
        %v530 = vpop.permute.xlu0 %529
        %531 = vrot.lane.b32.xlu0 %v285, 57
        %v532 = vpop.permute.xlu0 %531
        %533 = vrot.lane.b32.xlu0 %v286, 57
        %v534 = vpop.permute.xlu0 %533
        %535 = vrot.lane.b32.xlu0 %v287, 57
        %v536 = vpop.permute.xlu0 %535
        %vm537 = vcmp.lt.s32.totalorder %v297, 57
        %v538 = vsel %vm537, %v534, %v536
        %v539 = vsel %vm537, %v532, %v534
        %v540 = vsel %vm537, %v530, %v532
        %v541 = vsel %vm537, %v536, %v530
        %s542 = scalar_lea.vmem [#allocation5], 6
        %v543 = vld [vmem:[%s542] ss:$8 sm:$0xf]
        %v545 = vlaneseq
        %v546 = vshrl.u32 %v545, 7
        %v547 = vsub.s32 0, %v546
        %v548 = vrot.slane %v543, %v547
        %v549 = vlaneseq
        %v550 = vshrl.u32 %v549, 7
        %v551 = vsub.s32 1, %v550
        %v552 = vrot.slane %v543, %v551
        %v553 = vlaneseq
        %v554 = vshrl.u32 %v553, 7
        %v555 = vsub.s32 2, %v554
        %v556 = vrot.slane %v543, %v555
        %v557 = vlaneseq
        %v558 = vshrl.u32 %v557, 7
        %v559 = vsub.s32 3, %v558
        %v560 = vrot.slane %v543, %v559
        %v565 = vmul.f32 %v541, %v548
        %v566 = vmul.f32 %v540, %v552
        %v567 = vmul.f32 %v539, %v556
        %v568 = vmul.f32 %v538, %v560
        %569 = vrot.lane.b32.xlu0 %v284, 56
        %v570 = vpop.permute.xlu0 %569
        %571 = vrot.lane.b32.xlu0 %v285, 56
        %v572 = vpop.permute.xlu0 %571
        %573 = vrot.lane.b32.xlu0 %v286, 56
        %v574 = vpop.permute.xlu0 %573
        %575 = vrot.lane.b32.xlu0 %v287, 56
        %v576 = vpop.permute.xlu0 %575
        %vm577 = vcmp.lt.s32.totalorder %v297, 56
        %v578 = vsel %vm577, %v574, %v576
        %v579 = vsel %vm577, %v572, %v574
        %v580 = vsel %vm577, %v570, %v572
        %v581 = vsel %vm577, %v576, %v570
        %s582 = scalar_lea.vmem [#allocation5], 7
        %v583 = vld [vmem:[%s582] ss:$8 sm:$0xf]
        %v585 = vlaneseq
        %v586 = vshrl.u32 %v585, 7
        %v587 = vsub.s32 0, %v586
        %v588 = vrot.slane %v583, %v587
        %v589 = vlaneseq
        %v590 = vshrl.u32 %v589, 7
        %v591 = vsub.s32 1, %v590
        %v592 = vrot.slane %v583, %v591
        %v593 = vlaneseq
        %v594 = vshrl.u32 %v593, 7
        %v595 = vsub.s32 2, %v594
        %v596 = vrot.slane %v583, %v595
        %v597 = vlaneseq
        %v598 = vshrl.u32 %v597, 7
        %v599 = vsub.s32 3, %v598
        %v600 = vrot.slane %v583, %v599
        %v605 = vmul.f32 %v581, %v588
        %v606 = vmul.f32 %v580, %v592
        %v607 = vmul.f32 %v579, %v596
        %v608 = vmul.f32 %v578, %v600
        %609 = vrot.lane.b32.xlu0 %v284, 55
        %v610 = vpop.permute.xlu0 %609
        %611 = vrot.lane.b32.xlu0 %v285, 55
        %v612 = vpop.permute.xlu0 %611
        %613 = vrot.lane.b32.xlu0 %v286, 55
        %v614 = vpop.permute.xlu0 %613
        %615 = vrot.lane.b32.xlu0 %v287, 55
        %v616 = vpop.permute.xlu0 %615
        %vm617 = vcmp.lt.s32.totalorder %v297, 55
        %v618 = vsel %vm617, %v614, %v616
        %v619 = vsel %vm617, %v612, %v614
        %v620 = vsel %vm617, %v610, %v612
        %v621 = vsel %vm617, %v616, %v610
        %s622 = scalar_lea.vmem [#allocation5], 32
        %v623 = vld [vmem:[%s622] ss:$8 sm:$0xf]
        %v625 = vlaneseq
        %v626 = vshrl.u32 %v625, 7
        %v627 = vsub.s32 0, %v626
        %v628 = vrot.slane %v623, %v627
        %v629 = vlaneseq
        %v630 = vshrl.u32 %v629, 7
        %v631 = vsub.s32 1, %v630
        %v632 = vrot.slane %v623, %v631
        %v633 = vlaneseq
        %v634 = vshrl.u32 %v633, 7
        %v635 = vsub.s32 2, %v634
        %v636 = vrot.slane %v623, %v635
        %v637 = vlaneseq
        %v638 = vshrl.u32 %v637, 7
        %v639 = vsub.s32 3, %v638
        %v640 = vrot.slane %v623, %v639
        %v645 = vmul.f32 %v621, %v628
        %v646 = vmul.f32 %v620, %v632
        %v647 = vmul.f32 %v619, %v636
        %v648 = vmul.f32 %v618, %v640
        %649 = vrot.lane.b32.xlu0 %v284, 9
        %v650 = vpop.permute.xlu0 %649
        %651 = vrot.lane.b32.xlu0 %v285, 9
        %v652 = vpop.permute.xlu0 %651
        %653 = vrot.lane.b32.xlu0 %v286, 9
        %v654 = vpop.permute.xlu0 %653
        %655 = vrot.lane.b32.xlu0 %v287, 9
        %v656 = vpop.permute.xlu0 %655
        %vm657 = vcmp.lt.s32.totalorder %v297, 9
        %v658 = vsel %vm657, %v654, %v656
        %v659 = vsel %vm657, %v652, %v654
        %v660 = vsel %vm657, %v650, %v652
        %v661 = vsel %vm657, %v656, %v650
        %s662 = scalar_lea.vmem [#allocation5], 33
        %v663 = vld [vmem:[%s662] ss:$8 sm:$0xf]
        %v665 = vlaneseq
        %v666 = vshrl.u32 %v665, 7
        %v667 = vsub.s32 0, %v666
        %v668 = vrot.slane %v663, %v667
        %v669 = vlaneseq
        %v670 = vshrl.u32 %v669, 7
        %v671 = vsub.s32 1, %v670
        %v672 = vrot.slane %v663, %v671
        %v673 = vlaneseq
        %v674 = vshrl.u32 %v673, 7
        %v675 = vsub.s32 2, %v674
        %v676 = vrot.slane %v663, %v675
        %v677 = vlaneseq
        %v678 = vshrl.u32 %v677, 7
        %v679 = vsub.s32 3, %v678
        %v680 = vrot.slane %v663, %v679
        %v685 = vmul.f32 %v661, %v668
        %v686 = vmul.f32 %v660, %v672
        %v687 = vmul.f32 %v659, %v676
        %v688 = vmul.f32 %v658, %v680
        %689 = vrot.lane.b32.xlu0 %v284, 8
        %v690 = vpop.permute.xlu0 %689
        %691 = vrot.lane.b32.xlu0 %v285, 8
        %v692 = vpop.permute.xlu0 %691
        %693 = vrot.lane.b32.xlu0 %v286, 8
        %v694 = vpop.permute.xlu0 %693
        %695 = vrot.lane.b32.xlu0 %v287, 8
        %v696 = vpop.permute.xlu0 %695
        %vm697 = vcmp.lt.s32.totalorder %v297, 8
        %v698 = vsel %vm697, %v694, %v696
        %v699 = vsel %vm697, %v692, %v694
        %v700 = vsel %vm697, %v690, %v692
        %v701 = vsel %vm697, %v696, %v690
        %s702 = scalar_lea.vmem [#allocation5], 34
        %v703 = vld [vmem:[%s702] ss:$8 sm:$0xf]
        %v705 = vlaneseq
        %v706 = vshrl.u32 %v705, 7
        %v707 = vsub.s32 0, %v706
        %v708 = vrot.slane %v703, %v707
        %v709 = vlaneseq
        %v710 = vshrl.u32 %v709, 7
        %v711 = vsub.s32 1, %v710
        %v712 = vrot.slane %v703, %v711
        %v713 = vlaneseq
        %v714 = vshrl.u32 %v713, 7
        %v715 = vsub.s32 2, %v714
        %v716 = vrot.slane %v703, %v715
        %v717 = vlaneseq
        %v718 = vshrl.u32 %v717, 7
        %v719 = vsub.s32 3, %v718
        %v720 = vrot.slane %v703, %v719
        %v725 = vmul.f32 %v701, %v708
        %v726 = vmul.f32 %v700, %v712
        %v727 = vmul.f32 %v699, %v716
        %v728 = vmul.f32 %v698, %v720
        %729 = vrot.lane.b32.xlu0 %v284, 7
        %v730 = vpop.permute.xlu0 %729
        %731 = vrot.lane.b32.xlu0 %v285, 7
        %v732 = vpop.permute.xlu0 %731
        %733 = vrot.lane.b32.xlu0 %v286, 7
        %v734 = vpop.permute.xlu0 %733
        %735 = vrot.lane.b32.xlu0 %v287, 7
        %v736 = vpop.permute.xlu0 %735
        %vm737 = vcmp.lt.s32.totalorder %v297, 7
        %v738 = vsel %vm737, %v734, %v736
        %v739 = vsel %vm737, %v732, %v734
        %v740 = vsel %vm737, %v730, %v732
        %v741 = vsel %vm737, %v736, %v730
        %s742 = scalar_lea.vmem [#allocation5], 35
        %v743 = vld [vmem:[%s742] ss:$8 sm:$0xf]
        %v745 = vlaneseq
        %v746 = vshrl.u32 %v745, 7
        %v747 = vsub.s32 0, %v746
        %v748 = vrot.slane %v743, %v747
        %v749 = vlaneseq
        %v750 = vshrl.u32 %v749, 7
        %v751 = vsub.s32 1, %v750
        %v752 = vrot.slane %v743, %v751
        %v753 = vlaneseq
        %v754 = vshrl.u32 %v753, 7
        %v755 = vsub.s32 2, %v754
        %v756 = vrot.slane %v743, %v755
        %v757 = vlaneseq
        %v758 = vshrl.u32 %v757, 7
        %v759 = vsub.s32 3, %v758
        %v760 = vrot.slane %v743, %v759
        %v765 = vmul.f32 %v741, %v748
        %v766 = vmul.f32 %v740, %v752
        %v767 = vmul.f32 %v739, %v756
        %v768 = vmul.f32 %v738, %v760
        %769 = vrot.lane.b32.xlu0 %v284, 1
        %v770 = vpop.permute.xlu0 %769
        %771 = vrot.lane.b32.xlu0 %v285, 1
        %v772 = vpop.permute.xlu0 %771
        %773 = vrot.lane.b32.xlu0 %v286, 1
        %v774 = vpop.permute.xlu0 %773
        %775 = vrot.lane.b32.xlu0 %v287, 1
        %v776 = vpop.permute.xlu0 %775
        %vm777 = vcmp.lt.s32.totalorder %v297, 1
        %v778 = vsel %vm777, %v774, %v776
        %v779 = vsel %vm777, %v772, %v774
        %v780 = vsel %vm777, %v770, %v772
        %v781 = vsel %vm777, %v776, %v770
        %s782 = scalar_lea.vmem [#allocation5], 36
        %v783 = vld [vmem:[%s782] ss:$8 sm:$0xf]
        %v785 = vlaneseq
        %v786 = vshrl.u32 %v785, 7
        %v787 = vsub.s32 0, %v786
        %v788 = vrot.slane %v783, %v787
        %v789 = vlaneseq
        %v790 = vshrl.u32 %v789, 7
        %v791 = vsub.s32 1, %v790
        %v792 = vrot.slane %v783, %v791
        %v793 = vlaneseq
        %v794 = vshrl.u32 %v793, 7
        %v795 = vsub.s32 2, %v794
        %v796 = vrot.slane %v783, %v795
        %v797 = vlaneseq
        %v798 = vshrl.u32 %v797, 7
        %v799 = vsub.s32 3, %v798
        %v800 = vrot.slane %v783, %v799
        %v805 = vmul.f32 %v781, %v788
        %v806 = vmul.f32 %v780, %v792
        %v807 = vmul.f32 %v779, %v796
        %v808 = vmul.f32 %v778, %v800
        %809 = vrot.lane.b32.xlu0 %v284, 127
        %v810 = vpop.permute.xlu0 %809
        %811 = vrot.lane.b32.xlu0 %v285, 127
        %v812 = vpop.permute.xlu0 %811
        %813 = vrot.lane.b32.xlu0 %v286, 127
        %v814 = vpop.permute.xlu0 %813
        %815 = vrot.lane.b32.xlu0 %v287, 127
        %v816 = vpop.permute.xlu0 %815
        %vm817 = vcmp.lt.s32.totalorder %v297, 127
        %v818 = vsel %vm817, %v814, %v816
        %v819 = vsel %vm817, %v812, %v814
        %v820 = vsel %vm817, %v810, %v812
        %v821 = vsel %vm817, %v816, %v810
        %s822 = scalar_lea.vmem [#allocation5], 38
        %v823 = vld [vmem:[%s822] ss:$8 sm:$0xf]
        %v825 = vlaneseq
        %v826 = vshrl.u32 %v825, 7
        %v827 = vsub.s32 0, %v826
        %v828 = vrot.slane %v823, %v827
        %v829 = vlaneseq
        %v830 = vshrl.u32 %v829, 7
        %v831 = vsub.s32 1, %v830
        %v832 = vrot.slane %v823, %v831
        %v833 = vlaneseq
        %v834 = vshrl.u32 %v833, 7
        %v835 = vsub.s32 2, %v834
        %v836 = vrot.slane %v823, %v835
        %v837 = vlaneseq
        %v838 = vshrl.u32 %v837, 7
        %v839 = vsub.s32 3, %v838
        %v840 = vrot.slane %v823, %v839
        %v845 = vmul.f32 %v820, %v828
        %v846 = vmul.f32 %v819, %v832
        %v847 = vmul.f32 %v818, %v836
        %v848 = vmul.f32 %v821, %v840
        %849 = vrot.lane.b32.xlu0 %v284, 121
        %v850 = vpop.permute.xlu0 %849
        %851 = vrot.lane.b32.xlu0 %v285, 121
        %v852 = vpop.permute.xlu0 %851
        %853 = vrot.lane.b32.xlu0 %v286, 121
        %v854 = vpop.permute.xlu0 %853
        %855 = vrot.lane.b32.xlu0 %v287, 121
        %v856 = vpop.permute.xlu0 %855
        %vm857 = vcmp.lt.s32.totalorder %v297, 121
        %v858 = vsel %vm857, %v854, %v856
        %v859 = vsel %vm857, %v852, %v854
        %v860 = vsel %vm857, %v850, %v852
        %v861 = vsel %vm857, %v856, %v850
        %s862 = scalar_lea.vmem [#allocation5], 39
        %v863 = vld [vmem:[%s862] ss:$8 sm:$0xf]
        %v865 = vlaneseq
        %v866 = vshrl.u32 %v865, 7
        %v867 = vsub.s32 0, %v866
        %v868 = vrot.slane %v863, %v867
        %v869 = vlaneseq
        %v870 = vshrl.u32 %v869, 7
        %v871 = vsub.s32 1, %v870
        %v872 = vrot.slane %v863, %v871
        %v873 = vlaneseq
        %v874 = vshrl.u32 %v873, 7
        %v875 = vsub.s32 2, %v874
        %v876 = vrot.slane %v863, %v875
        %v877 = vlaneseq
        %v878 = vshrl.u32 %v877, 7
        %v879 = vsub.s32 3, %v878
        %v880 = vrot.slane %v863, %v879
        %v885 = vmul.f32 %v860, %v868
        %v886 = vmul.f32 %v859, %v872
        %v887 = vmul.f32 %v858, %v876
        %v888 = vmul.f32 %v861, %v880
        %889 = vrot.lane.b32.xlu0 %v284, 120
        %v890 = vpop.permute.xlu0 %889
        %891 = vrot.lane.b32.xlu0 %v285, 120
        %v892 = vpop.permute.xlu0 %891
        %893 = vrot.lane.b32.xlu0 %v286, 120
        %v894 = vpop.permute.xlu0 %893
        %895 = vrot.lane.b32.xlu0 %v287, 120
        %v896 = vpop.permute.xlu0 %895
        %vm897 = vcmp.lt.s32.totalorder %v297, 120
        %v898 = vsel %vm897, %v894, %v896
        %v899 = vsel %vm897, %v892, %v894
        %v900 = vsel %vm897, %v890, %v892
        %v901 = vsel %vm897, %v896, %v890
        %s902 = scalar_lea.vmem [#allocation5], 64
        %v903 = vld [vmem:[%s902] ss:$8 sm:$0xf]
        %v905 = vlaneseq
        %v906 = vshrl.u32 %v905, 7
        %v907 = vsub.s32 0, %v906
        %v908 = vrot.slane %v903, %v907
        %v909 = vlaneseq
        %v910 = vshrl.u32 %v909, 7
        %v911 = vsub.s32 1, %v910
        %v912 = vrot.slane %v903, %v911
        %v913 = vlaneseq
        %v914 = vshrl.u32 %v913, 7
        %v915 = vsub.s32 2, %v914
        %v916 = vrot.slane %v903, %v915
        %v917 = vlaneseq
        %v918 = vshrl.u32 %v917, 7
        %v919 = vsub.s32 3, %v918
        %v920 = vrot.slane %v903, %v919
        %v925 = vmul.f32 %v900, %v908
        %v926 = vmul.f32 %v899, %v912
        %v927 = vmul.f32 %v898, %v916
        %v928 = vmul.f32 %v901, %v920
        %929 = vrot.lane.b32.xlu0 %v284, 119
        %v930 = vpop.permute.xlu0 %929
        %931 = vrot.lane.b32.xlu0 %v285, 119
        %v932 = vpop.permute.xlu0 %931
        %933 = vrot.lane.b32.xlu0 %v286, 119
        %v934 = vpop.permute.xlu0 %933
        %935 = vrot.lane.b32.xlu0 %v287, 119
        %v936 = vpop.permute.xlu0 %935
        %vm937 = vcmp.lt.s32.totalorder %v297, 119
        %v938 = vsel %vm937, %v934, %v936
        %v939 = vsel %vm937, %v932, %v934
        %v940 = vsel %vm937, %v930, %v932
        %v941 = vsel %vm937, %v936, %v930
        %s942 = scalar_lea.vmem [#allocation5], 65
        %v943 = vld [vmem:[%s942] ss:$8 sm:$0xf]
        %v945 = vlaneseq
        %v946 = vshrl.u32 %v945, 7
        %v947 = vsub.s32 0, %v946
        %v948 = vrot.slane %v943, %v947
        %v949 = vlaneseq
        %v950 = vshrl.u32 %v949, 7
        %v951 = vsub.s32 1, %v950
        %v952 = vrot.slane %v943, %v951
        %v953 = vlaneseq
        %v954 = vshrl.u32 %v953, 7
        %v955 = vsub.s32 2, %v954
        %v956 = vrot.slane %v943, %v955
        %v957 = vlaneseq
        %v958 = vshrl.u32 %v957, 7
        %v959 = vsub.s32 3, %v958
        %v960 = vrot.slane %v943, %v959
        %v965 = vmul.f32 %v940, %v948
        %v966 = vmul.f32 %v939, %v952
        %v967 = vmul.f32 %v938, %v956
        %v968 = vmul.f32 %v941, %v960
        %s969 = scalar_lea.vmem [#allocation5], 66
        %v970 = vld [vmem:[%s969] ss:$8 sm:$0xf]
        %v972 = vlaneseq
        %v973 = vshrl.u32 %v972, 7
        %v974 = vsub.s32 0, %v973
        %v975 = vrot.slane %v970, %v974
        %v976 = vlaneseq
        %v977 = vshrl.u32 %v976, 7
        %v978 = vsub.s32 1, %v977
        %v979 = vrot.slane %v970, %v978
        %v980 = vlaneseq
        %v981 = vshrl.u32 %v980, 7
        %v982 = vsub.s32 2, %v981
        %v983 = vrot.slane %v970, %v982
        %v984 = vlaneseq
        %v985 = vshrl.u32 %v984, 7
        %v986 = vsub.s32 3, %v985
        %v987 = vrot.slane %v970, %v986
        %v992 = vmul.f32 %v301, %v975
        %v993 = vmul.f32 %v300, %v979
        %v994 = vmul.f32 %v299, %v983
        %v995 = vmul.f32 %v302, %v987
        %s996 = scalar_lea.vmem [#allocation5], 67
        %v997 = vld [vmem:[%s996] ss:$8 sm:$0xf]
        %v999 = vlaneseq
        %v1000 = vshrl.u32 %v999, 7
        %v1001 = vsub.s32 0, %v1000
        %v1002 = vrot.slane %v997, %v1001
        %v1003 = vlaneseq
        %v1004 = vshrl.u32 %v1003, 7
        %v1005 = vsub.s32 1, %v1004
        %v1006 = vrot.slane %v997, %v1005
        %v1007 = vlaneseq
        %v1008 = vshrl.u32 %v1007, 7
        %v1009 = vsub.s32 2, %v1008
        %v1010 = vrot.slane %v997, %v1009
        %v1011 = vlaneseq
        %v1012 = vshrl.u32 %v1011, 7
        %v1013 = vsub.s32 3, %v1012
        %v1014 = vrot.slane %v997, %v1013
        %v1019 = vmul.f32 %v340, %v1002
        %v1020 = vmul.f32 %v339, %v1006
        %v1021 = vmul.f32 %v338, %v1010
        %v1022 = vmul.f32 %v341, %v1014
        %s1023 = scalar_lea.vmem [#allocation5], 68
        %v1024 = vld [vmem:[%s1023] ss:$8 sm:$0xf]
        %v1026 = vlaneseq
        %v1027 = vshrl.u32 %v1026, 7
        %v1028 = vsub.s32 0, %v1027
        %v1029 = vrot.slane %v1024, %v1028
        %v1030 = vlaneseq
        %v1031 = vshrl.u32 %v1030, 7
        %v1032 = vsub.s32 1, %v1031
        %v1033 = vrot.slane %v1024, %v1032
        %v1034 = vlaneseq
        %v1035 = vshrl.u32 %v1034, 7
        %v1036 = vsub.s32 2, %v1035
        %v1037 = vrot.slane %v1024, %v1036
        %v1038 = vlaneseq
        %v1039 = vshrl.u32 %v1038, 7
        %v1040 = vsub.s32 3, %v1039
        %v1041 = vrot.slane %v1024, %v1040
        %v1046 = vmul.f32 %v380, %v1029
        %v1047 = vmul.f32 %v379, %v1033
        %v1048 = vmul.f32 %v378, %v1037
        %v1049 = vmul.f32 %v381, %v1041
        %s1050 = scalar_lea.vmem [#allocation5], 69
        %v1051 = vld [vmem:[%s1050] ss:$8 sm:$0xf]
        %v1053 = vlaneseq
        %v1054 = vshrl.u32 %v1053, 7
        %v1055 = vsub.s32 0, %v1054
        %v1056 = vrot.slane %v1051, %v1055
        %v1057 = vlaneseq
        %v1058 = vshrl.u32 %v1057, 7
        %v1059 = vsub.s32 1, %v1058
        %v1060 = vrot.slane %v1051, %v1059
        %v1061 = vlaneseq
        %v1062 = vshrl.u32 %v1061, 7
        %v1063 = vsub.s32 2, %v1062
        %v1064 = vrot.slane %v1051, %v1063
        %v1065 = vlaneseq
        %v1066 = vshrl.u32 %v1065, 7
        %v1067 = vsub.s32 3, %v1066
        %v1068 = vrot.slane %v1051, %v1067
        %v1073 = vmul.f32 %v420, %v1056
        %v1074 = vmul.f32 %v419, %v1060
        %v1075 = vmul.f32 %v418, %v1064
        %v1076 = vmul.f32 %v421, %v1068
        %s1077 = scalar_lea.vmem [#allocation5], 70
        %v1078 = vld [vmem:[%s1077] ss:$8 sm:$0xf]
        %v1080 = vlaneseq
        %v1081 = vshrl.u32 %v1080, 7
        %v1082 = vsub.s32 0, %v1081
        %v1083 = vrot.slane %v1078, %v1082
        %v1084 = vlaneseq
        %v1085 = vshrl.u32 %v1084, 7
        %v1086 = vsub.s32 1, %v1085
        %v1087 = vrot.slane %v1078, %v1086
        %v1088 = vlaneseq
        %v1089 = vshrl.u32 %v1088, 7
        %v1090 = vsub.s32 2, %v1089
        %v1091 = vrot.slane %v1078, %v1090
        %v1092 = vlaneseq
        %v1093 = vshrl.u32 %v1092, 7
        %v1094 = vsub.s32 3, %v1093
        %v1095 = vrot.slane %v1078, %v1094
        %v1100 = vmul.f32 %v460, %v1083
        %v1101 = vmul.f32 %v459, %v1087
        %v1102 = vmul.f32 %v458, %v1091
        %v1103 = vmul.f32 %v461, %v1095
        %s1104 = scalar_lea.vmem [#allocation5], 71
        %v1105 = vld [vmem:[%s1104] ss:$8 sm:$0xf]
        %v1107 = vlaneseq
        %v1108 = vshrl.u32 %v1107, 7
        %v1109 = vsub.s32 0, %v1108
        %v1110 = vrot.slane %v1105, %v1109
        %v1111 = vlaneseq
        %v1112 = vshrl.u32 %v1111, 7
        %v1113 = vsub.s32 1, %v1112
        %v1114 = vrot.slane %v1105, %v1113
        %v1115 = vlaneseq
        %v1116 = vshrl.u32 %v1115, 7
        %v1117 = vsub.s32 2, %v1116
        %v1118 = vrot.slane %v1105, %v1117
        %v1119 = vlaneseq
        %v1120 = vshrl.u32 %v1119, 7
        %v1121 = vsub.s32 3, %v1120
        %v1122 = vrot.slane %v1105, %v1121
        %v1127 = vmul.f32 %v500, %v1110
        %v1128 = vmul.f32 %v499, %v1114
        %v1129 = vmul.f32 %v498, %v1118
        %v1130 = vmul.f32 %v501, %v1122
        %s1131 = scalar_lea.vmem [#allocation5], 96
        %v1132 = vld [vmem:[%s1131] ss:$8 sm:$0xf]
        %v1134 = vlaneseq
        %v1135 = vshrl.u32 %v1134, 7
        %v1136 = vsub.s32 0, %v1135
        %v1137 = vrot.slane %v1132, %v1136
        %v1138 = vlaneseq
        %v1139 = vshrl.u32 %v1138, 7
        %v1140 = vsub.s32 1, %v1139
        %v1141 = vrot.slane %v1132, %v1140
        %v1142 = vlaneseq
        %v1143 = vshrl.u32 %v1142, 7
        %v1144 = vsub.s32 2, %v1143
        %v1145 = vrot.slane %v1132, %v1144
        %v1146 = vlaneseq
        %v1147 = vshrl.u32 %v1146, 7
        %v1148 = vsub.s32 3, %v1147
        %v1149 = vrot.slane %v1132, %v1148
        %v1154 = vmul.f32 %v540, %v1137
        %v1155 = vmul.f32 %v539, %v1141
        %v1156 = vmul.f32 %v538, %v1145
        %v1157 = vmul.f32 %v541, %v1149
        %s1158 = scalar_lea.vmem [#allocation5], 97
        %v1159 = vld [vmem:[%s1158] ss:$8 sm:$0xf]
        %v1161 = vlaneseq
        %v1162 = vshrl.u32 %v1161, 7
        %v1163 = vsub.s32 0, %v1162
        %v1164 = vrot.slane %v1159, %v1163
        %v1165 = vlaneseq
        %v1166 = vshrl.u32 %v1165, 7
        %v1167 = vsub.s32 1, %v1166
        %v1168 = vrot.slane %v1159, %v1167
        %v1169 = vlaneseq
        %v1170 = vshrl.u32 %v1169, 7
        %v1171 = vsub.s32 2, %v1170
        %v1172 = vrot.slane %v1159, %v1171
        %v1173 = vlaneseq
        %v1174 = vshrl.u32 %v1173, 7
        %v1175 = vsub.s32 3, %v1174
        %v1176 = vrot.slane %v1159, %v1175
        %v1181 = vmul.f32 %v580, %v1164
        %v1182 = vmul.f32 %v579, %v1168
        %v1183 = vmul.f32 %v578, %v1172
        %v1184 = vmul.f32 %v581, %v1176
        %s1185 = scalar_lea.vmem [#allocation5], 98
        %v1186 = vld [vmem:[%s1185] ss:$8 sm:$0xf]
        %v1188 = vlaneseq
        %v1189 = vshrl.u32 %v1188, 7
        %v1190 = vsub.s32 0, %v1189
        %v1191 = vrot.slane %v1186, %v1190
        %v1192 = vlaneseq
        %v1193 = vshrl.u32 %v1192, 7
        %v1194 = vsub.s32 1, %v1193
        %v1195 = vrot.slane %v1186, %v1194
        %v1196 = vlaneseq
        %v1197 = vshrl.u32 %v1196, 7
        %v1198 = vsub.s32 2, %v1197
        %v1199 = vrot.slane %v1186, %v1198
        %v1200 = vlaneseq
        %v1201 = vshrl.u32 %v1200, 7
        %v1202 = vsub.s32 3, %v1201
        %v1203 = vrot.slane %v1186, %v1202
        %v1208 = vmul.f32 %v620, %v1191
        %v1209 = vmul.f32 %v619, %v1195
        %v1210 = vmul.f32 %v618, %v1199
        %v1211 = vmul.f32 %v621, %v1203
        %v1212 = vpack.c.bf16 %v365, %v325
        %v1213 = vpack.c.bf16 %v366, %v326
        %v1214 = vpack.c.bf16 %v367, %v327
        %v1215 = vpack.c.bf16 %v368, %v328
        %v1216 = vpack.c.bf16 %v445, %v405
        %v1217 = vpack.c.bf16 %v446, %v406
        %v1218 = vpack.c.bf16 %v447, %v407
        %v1219 = vpack.c.bf16 %v448, %v408
        %v1220 = vpack.c.bf16 %v525, %v485
        %v1221 = vpack.c.bf16 %v526, %v486
        %v1222 = vpack.c.bf16 %v527, %v487
        %v1223 = vpack.c.bf16 %v528, %v488
        %v1224 = vpack.c.bf16 %v605, %v565
        %v1225 = vpack.c.bf16 %v606, %v566
        %v1226 = vpack.c.bf16 %v607, %v567
        %v1227 = vpack.c.bf16 %v608, %v568
        %v1228 = vpack.c.bf16 %v685, %v645
        %v1229 = vpack.c.bf16 %v686, %v646
        %v1230 = vpack.c.bf16 %v687, %v647
        %v1231 = vpack.c.bf16 %v688, %v648
        %v1232 = vpack.c.bf16 %v765, %v725
        %v1233 = vpack.c.bf16 %v766, %v726
        %v1234 = vpack.c.bf16 %v767, %v727
        %v1235 = vpack.c.bf16 %v768, %v728
        %v1236 = vpack.c.bf16 %v284, %v805
        %v1237 = vpack.c.bf16 %v285, %v806
        %v1238 = vpack.c.bf16 %v286, %v807
        %v1239 = vpack.c.bf16 %v287, %v808
        %v1240 = vpack.c.bf16 %v885, %v845
        %v1241 = vpack.c.bf16 %v886, %v846
        %v1242 = vpack.c.bf16 %v887, %v847
        %v1243 = vpack.c.bf16 %v888, %v848
        %v1244 = vpack.c.bf16 %v965, %v925
        %v1245 = vpack.c.bf16 %v966, %v926
        %v1246 = vpack.c.bf16 %v967, %v927
        %v1247 = vpack.c.bf16 %v968, %v928
        %v1248 = vpack.c.bf16 %v1019, %v992
        %v1249 = vpack.c.bf16 %v1020, %v993
        %v1250 = vpack.c.bf16 %v1021, %v994
        %v1251 = vpack.c.bf16 %v1022, %v995
        %v1252 = vpack.c.bf16 %v1073, %v1046
        %v1253 = vpack.c.bf16 %v1074, %v1047
        %v1254 = vpack.c.bf16 %v1075, %v1048
        %v1255 = vpack.c.bf16 %v1076, %v1049
        %v1256 = vpack.c.bf16 %v1127, %v1100
        %v1257 = vpack.c.bf16 %v1128, %v1101
        %v1258 = vpack.c.bf16 %v1129, %v1102
        %v1259 = vpack.c.bf16 %v1130, %v1103
        %v1260 = vpack.c.bf16 %v1181, %v1154
        %v1261 = vpack.c.bf16 %v1182, %v1155
        %v1262 = vpack.c.bf16 %v1183, %v1156
        %v1263 = vpack.c.bf16 %v1184, %v1157
        %v1264 = vpack.c.bf16 %v1208, %v1208
        %v1265 = vpack.c.bf16 %v1209, %v1209
        %v1266 = vpack.c.bf16 %v1210, %v1210
        %v1267 = vpack.c.bf16 %v1211, %v1211
        %v1268 = vld [vmem:[%s2] sm:$0xff]
        %v1269 = vld [vmem:[%s3] sm:$0xff]
        %1271 = vset.pattern.permute.xlu0 0
        %1272 = vperm.xlu0 %1271, %v1269
        %v1273 = vpop.permute.xlu0 %1272
        %v1276 = vunpack.c.l.b16 %v1268
        %v1277 = vunpack.c.h.b16 %v1268
        %v1278 = vpack.c.b16 %v1276, %v1276
        %v1279 = vpack.c.b16 %v1277, %v1277
        %vm1281 = vcmask 719872
        %v1283 = vsel %vm1281, %v1279, 0
        %vm1285 = vcmask 1043456
        %v1287 = vsel %vm1285, %v1264, 0
        %v1290 = vsel %vm1285, %v1265, 0
        %v1293 = vsel %vm1285, %v1266, 0
        %v1296 = vsel %vm1285, %v1267, 0
        %1298 = vmatprep.subr.bf16.mxu0 %v1213
        %1299 = vmatpush1.bf16.msra.mxu0 %v1212
        %1300 = vmatprep.subr.bf16.mxu0 %v1217
        %1301 = vmatpush1.bf16.msra.mxu0 %v1216
        %1302 = vmatprep.subr.bf16.mxu0 %v1221
        %1303 = vmatpush1.bf16.msra.mxu0 %v1220
        %1304 = vmatprep.subr.bf16.mxu0 %v1225
        %1305 = vmatpush1.bf16.msra.mxu0 %v1224
        %1306 = vmatprep.subr.bf16.mxu0 %v1229
        %1307 = vmatpush1.bf16.msra.mxu0 %v1228
        %1308 = vmatprep.subr.bf16.mxu0 %v1233
        %1309 = vmatpush1.bf16.msra.mxu0 %v1232
        %1310 = vmatprep.subr.bf16.mxu0 %v1237
        %1311 = vmatpush1.bf16.msra.mxu0 %v1236
        %1312 = vmatprep.subr.bf16.mxu0 %v1241
        %1313 = vmatpush1.bf16.msra.mxu0 %v1240
        %1314 = vmatprep.subr.bf16.mxu0 %v1245
        %1315 = vmatpush1.bf16.msra.mxu0 %v1244
        %1316 = vmatprep.subr.bf16.mxu0 %v1249
        %1317 = vmatpush1.bf16.msra.mxu0 %v1248
        %1318 = vmatprep.subr.bf16.mxu0 %v1253
        %1319 = vmatpush1.bf16.msra.mxu0 %v1252
        %1320 = vmatprep.subr.bf16.mxu0 %v1257
        %1321 = vmatpush1.bf16.msra.mxu0 %v1256
        %1322 = vmatprep.subr.bf16.mxu0 %v1261
        %1323 = vmatpush1.bf16.msra.mxu0 %v1260
        %1324 = vmatprep.subr.bf16.mxu0 %v1290
        %1325 = vmatpush1.bf16.msra.mxu0 %v1287
        %1326 = vmatprep.subr.bf16.mxu0 0
        %1327 = vmatpush1.bf16.msra.mxu0 0
        %1328 = vmatprep.subr.bf16.mxu0 0
        %1329 = vmatpush1.bf16.msra.mxu0 0
        %1330 = vmatprep.mubr.bf16.mxu0 %v1283
        %1331 = vmatmul.mubr.bf16.gmra.mrb[0].mxu0 %v1278
        %v1332 = vpop.f32.mrb[0].mxu0
        %v1333 = vadd.f32 %v1273, %v1332
        %v1334 = vpop.f32.mrb[0].mxu0
        %v1335 = vadd.f32 %v1273, %v1334
        %v1336 = vpop.f32.mrb[0].mxu0
        %v1337 = vpop.f32.mrb[0].mxu0
        %1338 = vdwg.mxu0
        %1339 = vmatprep.subr.bf16.mxu0 %v1215
        %1340 = vmatpush1.bf16.msra.mxu0 %v1214
        %1341 = vmatprep.subr.bf16.mxu0 %v1219
        %1342 = vmatpush1.bf16.msra.mxu0 %v1218
        %1343 = vmatprep.subr.bf16.mxu0 %v1223
        %1344 = vmatpush1.bf16.msra.mxu0 %v1222
        %1345 = vmatprep.subr.bf16.mxu0 %v1227
        %1346 = vmatpush1.bf16.msra.mxu0 %v1226
        %1347 = vmatprep.subr.bf16.mxu0 %v1231
        %1348 = vmatpush1.bf16.msra.mxu0 %v1230
        %1349 = vmatprep.subr.bf16.mxu0 %v1235
        %1350 = vmatpush1.bf16.msra.mxu0 %v1234
        %1351 = vmatprep.subr.bf16.mxu0 %v1239
        %1352 = vmatpush1.bf16.msra.mxu0 %v1238
        %1353 = vmatprep.subr.bf16.mxu0 %v1243
        %1354 = vmatpush1.bf16.msra.mxu0 %v1242
        %1355 = vmatprep.subr.bf16.mxu0 %v1247
        %1356 = vmatpush1.bf16.msra.mxu0 %v1246
        %1357 = vmatprep.subr.bf16.mxu0 %v1251
        %1358 = vmatpush1.bf16.msra.mxu0 %v1250
        %1359 = vmatprep.subr.bf16.mxu0 %v1255
        %1360 = vmatpush1.bf16.msra.mxu0 %v1254
        %1361 = vmatprep.subr.bf16.mxu0 %v1259
        %1362 = vmatpush1.bf16.msra.mxu0 %v1258
        %1363 = vmatprep.subr.bf16.mxu0 %v1263
        %1364 = vmatpush1.bf16.msra.mxu0 %v1262
        %1365 = vmatprep.subr.bf16.mxu0 %v1296
        %1366 = vmatpush1.bf16.msra.mxu0 %v1293
        %1367 = vmatprep.subr.bf16.mxu0 0
        %1368 = vmatpush1.bf16.msra.mxu0 0
        %1369 = vmatprep.subr.bf16.mxu0 0
        %1370 = vmatpush1.bf16.msra.mxu0 0
        %1371 = vmatprep.mubr.bf16.mxu0 %v1283
        %1372 = vmatmul.mubr.bf16.gmra.mrb[0].mxu0 %v1278
        %v1373 = vpop.f32.mrb[0].mxu0
        %v1374 = vadd.f32 %v1273, %v1373
        %v1375 = vpop.f32.mrb[0].mxu0
        %v1376 = vadd.f32 %v1273, %v1375
        %v1377 = vpop.f32.mrb[0].mxu0
        %v1378 = vpop.f32.mrb[0].mxu0
        %1379 = vdwg.mxu0
        %v1380 = vmax.f32 %v1333, 0.0
        %v1381 = vmax.f32 %v1335, 0.0
        %v1382 = vmax.f32 %v1374, 0.0
        %v1383 = vmax.f32 %v1376, 0.0
        %1384 = vrot.lane.b32.xlu0 %v1380, 73
        %v1385 = vpop.permute.xlu0 %1384
        %1386 = vrot.lane.b32.xlu0 %v1381, 73
        %v1387 = vpop.permute.xlu0 %1386
        %1388 = vrot.lane.b32.xlu0 %v1382, 73
        %v1389 = vpop.permute.xlu0 %1388
        %1390 = vrot.lane.b32.xlu0 %v1383, 73
        %v1391 = vpop.permute.xlu0 %1390
        %v1392 = vsel %vm298, %v1389, %v1391
        %v1393 = vsel %vm298, %v1387, %v1389
        %v1394 = vsel %vm298, %v1385, %v1387
        %v1395 = vsel %vm298, %v1391, %v1385
        %v1396 = vmul.f32 %v1395, %v308
        %v1397 = vmul.f32 %v1394, %v312
        %v1398 = vmul.f32 %v1393, %v316
        %v1399 = vmul.f32 %v1392, %v320
        %1400 = vrot.lane.b32.xlu0 %v1380, 72
        %v1401 = vpop.permute.xlu0 %1400
        %1402 = vrot.lane.b32.xlu0 %v1381, 72
        %v1403 = vpop.permute.xlu0 %1402
        %1404 = vrot.lane.b32.xlu0 %v1382, 72
        %v1405 = vpop.permute.xlu0 %1404
        %1406 = vrot.lane.b32.xlu0 %v1383, 72
        %v1407 = vpop.permute.xlu0 %1406
        %v1408 = vsel %vm337, %v1405, %v1407
        %v1409 = vsel %vm337, %v1403, %v1405
        %v1410 = vsel %vm337, %v1401, %v1403
        %v1411 = vsel %vm337, %v1407, %v1401
        %v1412 = vmul.f32 %v1411, %v348
        %v1413 = vmul.f32 %v1410, %v352
        %v1414 = vmul.f32 %v1409, %v356
        %v1415 = vmul.f32 %v1408, %v360
        %1416 = vrot.lane.b32.xlu0 %v1380, 71
        %v1417 = vpop.permute.xlu0 %1416
        %1418 = vrot.lane.b32.xlu0 %v1381, 71
        %v1419 = vpop.permute.xlu0 %1418
        %1420 = vrot.lane.b32.xlu0 %v1382, 71
        %v1421 = vpop.permute.xlu0 %1420
        %1422 = vrot.lane.b32.xlu0 %v1383, 71
        %v1423 = vpop.permute.xlu0 %1422
        %v1424 = vsel %vm377, %v1421, %v1423
        %v1425 = vsel %vm377, %v1419, %v1421
        %v1426 = vsel %vm377, %v1417, %v1419
        %v1427 = vsel %vm377, %v1423, %v1417
        %v1428 = vmul.f32 %v1427, %v388
        %v1429 = vmul.f32 %v1426, %v392
        %v1430 = vmul.f32 %v1425, %v396
        %v1431 = vmul.f32 %v1424, %v400
        %1432 = vrot.lane.b32.xlu0 %v1380, 65
        %v1433 = vpop.permute.xlu0 %1432
        %1434 = vrot.lane.b32.xlu0 %v1381, 65
        %v1435 = vpop.permute.xlu0 %1434
        %1436 = vrot.lane.b32.xlu0 %v1382, 65
        %v1437 = vpop.permute.xlu0 %1436
        %1438 = vrot.lane.b32.xlu0 %v1383, 65
        %v1439 = vpop.permute.xlu0 %1438
        %v1440 = vsel %vm417, %v1437, %v1439
        %v1441 = vsel %vm417, %v1435, %v1437
        %v1442 = vsel %vm417, %v1433, %v1435
        %v1443 = vsel %vm417, %v1439, %v1433
        %v1444 = vmul.f32 %v1443, %v428
        %v1445 = vmul.f32 %v1442, %v432
        %v1446 = vmul.f32 %v1441, %v436
        %v1447 = vmul.f32 %v1440, %v440
        %1448 = vrot.lane.b32.xlu0 %v1380, 64
        %v1449 = vpop.permute.xlu0 %1448
        %1450 = vrot.lane.b32.xlu0 %v1381, 64
        %v1451 = vpop.permute.xlu0 %1450
        %1452 = vrot.lane.b32.xlu0 %v1382, 64
        %v1453 = vpop.permute.xlu0 %1452
        %1454 = vrot.lane.b32.xlu0 %v1383, 64
        %v1455 = vpop.permute.xlu0 %1454
        %v1456 = vsel %vm457, %v1453, %v1455
        %v1457 = vsel %vm457, %v1451, %v1453
        %v1458 = vsel %vm457, %v1449, %v1451
        %v1459 = vsel %vm457, %v1455, %v1449
        %v1460 = vmul.f32 %v1459, %v468
        %v1461 = vmul.f32 %v1458, %v472
        %v1462 = vmul.f32 %v1457, %v476
        %v1463 = vmul.f32 %v1456, %v480
        %1464 = vrot.lane.b32.xlu0 %v1380, 63
        %v1465 = vpop.permute.xlu0 %1464
        %1466 = vrot.lane.b32.xlu0 %v1381, 63
        %v1467 = vpop.permute.xlu0 %1466
        %1468 = vrot.lane.b32.xlu0 %v1382, 63
        %v1469 = vpop.permute.xlu0 %1468
        %1470 = vrot.lane.b32.xlu0 %v1383, 63
        %v1471 = vpop.permute.xlu0 %1470
        %v1472 = vsel %vm497, %v1469, %v1471
        %v1473 = vsel %vm497, %v1467, %v1469
        %v1474 = vsel %vm497, %v1465, %v1467
        %v1475 = vsel %vm497, %v1471, %v1465
        %v1476 = vmul.f32 %v1475, %v508
        %v1477 = vmul.f32 %v1474, %v512
        %v1478 = vmul.f32 %v1473, %v516
        %v1479 = vmul.f32 %v1472, %v520
        %1480 = vrot.lane.b32.xlu0 %v1380, 57
        %v1481 = vpop.permute.xlu0 %1480
        %1482 = vrot.lane.b32.xlu0 %v1381, 57
        %v1483 = vpop.permute.xlu0 %1482
        %1484 = vrot.lane.b32.xlu0 %v1382, 57
        %v1485 = vpop.permute.xlu0 %1484
        %1486 = vrot.lane.b32.xlu0 %v1383, 57
        %v1487 = vpop.permute.xlu0 %1486
        %v1488 = vsel %vm537, %v1485, %v1487
        %v1489 = vsel %vm537, %v1483, %v1485
        %v1490 = vsel %vm537, %v1481, %v1483
        %v1491 = vsel %vm537, %v1487, %v1481
        %v1492 = vmul.f32 %v1491, %v548
        %v1493 = vmul.f32 %v1490, %v552
        %v1494 = vmul.f32 %v1489, %v556
        %v1495 = vmul.f32 %v1488, %v560
        %1496 = vrot.lane.b32.xlu0 %v1380, 56
        %v1497 = vpop.permute.xlu0 %1496
        %1498 = vrot.lane.b32.xlu0 %v1381, 56
        %v1499 = vpop.permute.xlu0 %1498
        %1500 = vrot.lane.b32.xlu0 %v1382, 56
        %v1501 = vpop.permute.xlu0 %1500
        %1502 = vrot.lane.b32.xlu0 %v1383, 56
        %v1503 = vpop.permute.xlu0 %1502
        %v1504 = vsel %vm577, %v1501, %v1503
        %v1505 = vsel %vm577, %v1499, %v1501
        %v1506 = vsel %vm577, %v1497, %v1499
        %v1507 = vsel %vm577, %v1503, %v1497
        %v1508 = vmul.f32 %v1507, %v588
        %v1509 = vmul.f32 %v1506, %v592
        %v1510 = vmul.f32 %v1505, %v596
        %v1511 = vmul.f32 %v1504, %v600
        %1512 = vrot.lane.b32.xlu0 %v1380, 55
        %v1513 = vpop.permute.xlu0 %1512
        %1514 = vrot.lane.b32.xlu0 %v1381, 55
        %v1515 = vpop.permute.xlu0 %1514
        %1516 = vrot.lane.b32.xlu0 %v1382, 55
        %v1517 = vpop.permute.xlu0 %1516
        %1518 = vrot.lane.b32.xlu0 %v1383, 55
        %v1519 = vpop.permute.xlu0 %1518
        %v1520 = vsel %vm617, %v1517, %v1519
        %v1521 = vsel %vm617, %v1515, %v1517
        %v1522 = vsel %vm617, %v1513, %v1515
        %v1523 = vsel %vm617, %v1519, %v1513
        %v1524 = vmul.f32 %v1523, %v628
        %v1525 = vmul.f32 %v1522, %v632
        %v1526 = vmul.f32 %v1521, %v636
        %v1527 = vmul.f32 %v1520, %v640
        %1528 = vrot.lane.b32.xlu0 %v1380, 9
        %v1529 = vpop.permute.xlu0 %1528
        %1530 = vrot.lane.b32.xlu0 %v1381, 9
        %v1531 = vpop.permute.xlu0 %1530
        %1532 = vrot.lane.b32.xlu0 %v1382, 9
        %v1533 = vpop.permute.xlu0 %1532
        %1534 = vrot.lane.b32.xlu0 %v1383, 9
        %v1535 = vpop.permute.xlu0 %1534
        %v1536 = vsel %vm657, %v1533, %v1535
        %v1537 = vsel %vm657, %v1531, %v1533
        %v1538 = vsel %vm657, %v1529, %v1531
        %v1539 = vsel %vm657, %v1535, %v1529
        %v1540 = vmul.f32 %v1539, %v668
        %v1541 = vmul.f32 %v1538, %v672
        %v1542 = vmul.f32 %v1537, %v676
        %v1543 = vmul.f32 %v1536, %v680
        %1544 = vrot.lane.b32.xlu0 %v1380, 8
        %v1545 = vpop.permute.xlu0 %1544
        %1546 = vrot.lane.b32.xlu0 %v1381, 8
        %v1547 = vpop.permute.xlu0 %1546
        %1548 = vrot.lane.b32.xlu0 %v1382, 8
        %v1549 = vpop.permute.xlu0 %1548
        %1550 = vrot.lane.b32.xlu0 %v1383, 8
        %v1551 = vpop.permute.xlu0 %1550
        %v1552 = vsel %vm697, %v1549, %v1551
        %v1553 = vsel %vm697, %v1547, %v1549
        %v1554 = vsel %vm697, %v1545, %v1547
        %v1555 = vsel %vm697, %v1551, %v1545
        %v1556 = vmul.f32 %v1555, %v708
        %v1557 = vmul.f32 %v1554, %v712
        %v1558 = vmul.f32 %v1553, %v716
        %v1559 = vmul.f32 %v1552, %v720
        %1560 = vrot.lane.b32.xlu0 %v1380, 7
        %v1561 = vpop.permute.xlu0 %1560
        %1562 = vrot.lane.b32.xlu0 %v1381, 7
        %v1563 = vpop.permute.xlu0 %1562
        %1564 = vrot.lane.b32.xlu0 %v1382, 7
        %v1565 = vpop.permute.xlu0 %1564
        %1566 = vrot.lane.b32.xlu0 %v1383, 7
        %v1567 = vpop.permute.xlu0 %1566
        %v1568 = vsel %vm737, %v1565, %v1567
        %v1569 = vsel %vm737, %v1563, %v1565
        %v1570 = vsel %vm737, %v1561, %v1563
        %v1571 = vsel %vm737, %v1567, %v1561
        %v1572 = vmul.f32 %v1571, %v748
        %v1573 = vmul.f32 %v1570, %v752
        %v1574 = vmul.f32 %v1569, %v756
        %v1575 = vmul.f32 %v1568, %v760
        %1576 = vrot.lane.b32.xlu0 %v1380, 1
        %v1577 = vpop.permute.xlu0 %1576
        %1578 = vrot.lane.b32.xlu0 %v1381, 1
        %v1579 = vpop.permute.xlu0 %1578
        %1580 = vrot.lane.b32.xlu0 %v1382, 1
        %v1581 = vpop.permute.xlu0 %1580
        %1582 = vrot.lane.b32.xlu0 %v1383, 1
        %v1583 = vpop.permute.xlu0 %1582
        %v1584 = vsel %vm777, %v1581, %v1583
        %v1585 = vsel %vm777, %v1579, %v1581
        %v1586 = vsel %vm777, %v1577, %v1579
        %v1587 = vsel %vm777, %v1583, %v1577
        %v1588 = vmul.f32 %v1587, %v788
        %v1589 = vmul.f32 %v1586, %v792
        %v1590 = vmul.f32 %v1585, %v796
        %v1591 = vmul.f32 %v1584, %v800
        %1592 = vrot.lane.b32.xlu0 %v1380, 127
        %v1593 = vpop.permute.xlu0 %1592
        %1594 = vrot.lane.b32.xlu0 %v1381, 127
        %v1595 = vpop.permute.xlu0 %1594
        %1596 = vrot.lane.b32.xlu0 %v1382, 127
        %v1597 = vpop.permute.xlu0 %1596
        %1598 = vrot.lane.b32.xlu0 %v1383, 127
        %v1599 = vpop.permute.xlu0 %1598
        %v1600 = vsel %vm817, %v1597, %v1599
        %v1601 = vsel %vm817, %v1595, %v1597
        %v1602 = vsel %vm817, %v1593, %v1595
        %v1603 = vsel %vm817, %v1599, %v1593
        %v1604 = vmul.f32 %v1602, %v828
        %v1605 = vmul.f32 %v1601, %v832
        %v1606 = vmul.f32 %v1600, %v836
        %v1607 = vmul.f32 %v1603, %v840
        %1608 = vrot.lane.b32.xlu0 %v1380, 121
        %v1609 = vpop.permute.xlu0 %1608
        %1610 = vrot.lane.b32.xlu0 %v1381, 121
        %v1611 = vpop.permute.xlu0 %1610
        %1612 = vrot.lane.b32.xlu0 %v1382, 121
        %v1613 = vpop.permute.xlu0 %1612
        %1614 = vrot.lane.b32.xlu0 %v1383, 121
        %v1615 = vpop.permute.xlu0 %1614
        %v1616 = vsel %vm857, %v1613, %v1615
        %v1617 = vsel %vm857, %v1611, %v1613
        %v1618 = vsel %vm857, %v1609, %v1611
        %v1619 = vsel %vm857, %v1615, %v1609
        %v1620 = vmul.f32 %v1618, %v868
        %v1621 = vmul.f32 %v1617, %v872
        %v1622 = vmul.f32 %v1616, %v876
        %v1623 = vmul.f32 %v1619, %v880
        %1624 = vrot.lane.b32.xlu0 %v1380, 120
        %v1625 = vpop.permute.xlu0 %1624
        %1626 = vrot.lane.b32.xlu0 %v1381, 120
        %v1627 = vpop.permute.xlu0 %1626
        %1628 = vrot.lane.b32.xlu0 %v1382, 120
        %v1629 = vpop.permute.xlu0 %1628
        %1630 = vrot.lane.b32.xlu0 %v1383, 120
        %v1631 = vpop.permute.xlu0 %1630
        %v1632 = vsel %vm897, %v1629, %v1631
        %v1633 = vsel %vm897, %v1627, %v1629
        %v1634 = vsel %vm897, %v1625, %v1627
        %v1635 = vsel %vm897, %v1631, %v1625
        %v1636 = vmul.f32 %v1634, %v908
        %v1637 = vmul.f32 %v1633, %v912
        %v1638 = vmul.f32 %v1632, %v916
        %v1639 = vmul.f32 %v1635, %v920
        %1640 = vrot.lane.b32.xlu0 %v1380, 119
        %v1641 = vpop.permute.xlu0 %1640
        %1642 = vrot.lane.b32.xlu0 %v1381, 119
        %v1643 = vpop.permute.xlu0 %1642
        %1644 = vrot.lane.b32.xlu0 %v1382, 119
        %v1645 = vpop.permute.xlu0 %1644
        %1646 = vrot.lane.b32.xlu0 %v1383, 119
        %v1647 = vpop.permute.xlu0 %1646
        %v1648 = vsel %vm937, %v1645, %v1647
        %v1649 = vsel %vm937, %v1643, %v1645
        %v1650 = vsel %vm937, %v1641, %v1643
        %v1651 = vsel %vm937, %v1647, %v1641
        %v1652 = vmul.f32 %v1650, %v948
        %v1653 = vmul.f32 %v1649, %v952
        %v1654 = vmul.f32 %v1648, %v956
        %v1655 = vmul.f32 %v1651, %v960
        %v1656 = vmul.f32 %v1394, %v975
        %v1657 = vmul.f32 %v1393, %v979
        %v1658 = vmul.f32 %v1392, %v983
        %v1659 = vmul.f32 %v1395, %v987
        %v1660 = vmul.f32 %v1410, %v1002
        %v1661 = vmul.f32 %v1409, %v1006
        %v1662 = vmul.f32 %v1408, %v1010
        %v1663 = vmul.f32 %v1411, %v1014
        %v1664 = vmul.f32 %v1426, %v1029
        %v1665 = vmul.f32 %v1425, %v1033
        %v1666 = vmul.f32 %v1424, %v1037
        %v1667 = vmul.f32 %v1427, %v1041
        %v1668 = vmul.f32 %v1442, %v1056
        %v1669 = vmul.f32 %v1441, %v1060
        %v1670 = vmul.f32 %v1440, %v1064
        %v1671 = vmul.f32 %v1443, %v1068
        %v1672 = vmul.f32 %v1458, %v1083
        %v1673 = vmul.f32 %v1457, %v1087
        %v1674 = vmul.f32 %v1456, %v1091
        %v1675 = vmul.f32 %v1459, %v1095
        %v1676 = vmul.f32 %v1474, %v1110
        %v1677 = vmul.f32 %v1473, %v1114
        %v1678 = vmul.f32 %v1472, %v1118
        %v1679 = vmul.f32 %v1475, %v1122
        %v1680 = vmul.f32 %v1490, %v1137
        %v1681 = vmul.f32 %v1489, %v1141
        %v1682 = vmul.f32 %v1488, %v1145
        %v1683 = vmul.f32 %v1491, %v1149
        %v1684 = vmul.f32 %v1506, %v1164
        %v1685 = vmul.f32 %v1505, %v1168
        %v1686 = vmul.f32 %v1504, %v1172
        %v1687 = vmul.f32 %v1507, %v1176
        %v1688 = vmul.f32 %v1522, %v1191
        %v1689 = vmul.f32 %v1521, %v1195
        %v1690 = vmul.f32 %v1520, %v1199
        %v1691 = vmul.f32 %v1523, %v1203
        %v1692 = vpack.c.bf16 %v1412, %v1396
        %v1693 = vpack.c.bf16 %v1413, %v1397
        %v1694 = vpack.c.bf16 %v1414, %v1398
        %v1695 = vpack.c.bf16 %v1415, %v1399
        %v1696 = vpack.c.bf16 %v1444, %v1428
        %v1697 = vpack.c.bf16 %v1445, %v1429
        %v1698 = vpack.c.bf16 %v1446, %v1430
        %v1699 = vpack.c.bf16 %v1447, %v1431
        %v1700 = vpack.c.bf16 %v1476, %v1460
        %v1701 = vpack.c.bf16 %v1477, %v1461
        %v1702 = vpack.c.bf16 %v1478, %v1462
        %v1703 = vpack.c.bf16 %v1479, %v1463
        %v1704 = vpack.c.bf16 %v1508, %v1492
        %v1705 = vpack.c.bf16 %v1509, %v1493
        %v1706 = vpack.c.bf16 %v1510, %v1494
        %v1707 = vpack.c.bf16 %v1511, %v1495
        %v1708 = vpack.c.bf16 %v1540, %v1524
        %v1709 = vpack.c.bf16 %v1541, %v1525
        %v1710 = vpack.c.bf16 %v1542, %v1526
        %v1711 = vpack.c.bf16 %v1543, %v1527
        %v1712 = vpack.c.bf16 %v1572, %v1556
        %v1713 = vpack.c.bf16 %v1573, %v1557
        %v1714 = vpack.c.bf16 %v1574, %v1558
        %v1715 = vpack.c.bf16 %v1575, %v1559
        %v1716 = vpack.c.bf16 %v1380, %v1588
        %v1717 = vpack.c.bf16 %v1381, %v1589
        %v1718 = vpack.c.bf16 %v1382, %v1590
        %v1719 = vpack.c.bf16 %v1383, %v1591
        %v1720 = vpack.c.bf16 %v1620, %v1604
        %v1721 = vpack.c.bf16 %v1621, %v1605
        %v1722 = vpack.c.bf16 %v1622, %v1606
        %v1723 = vpack.c.bf16 %v1623, %v1607
        %v1724 = vpack.c.bf16 %v1652, %v1636
        %v1725 = vpack.c.bf16 %v1653, %v1637
        %v1726 = vpack.c.bf16 %v1654, %v1638
        %v1727 = vpack.c.bf16 %v1655, %v1639
        %v1728 = vpack.c.bf16 %v1660, %v1656
        %v1729 = vpack.c.bf16 %v1661, %v1657
        %v1730 = vpack.c.bf16 %v1662, %v1658
        %v1731 = vpack.c.bf16 %v1663, %v1659
        %v1732 = vpack.c.bf16 %v1668, %v1664
        %v1733 = vpack.c.bf16 %v1669, %v1665
        %v1734 = vpack.c.bf16 %v1670, %v1666
        %v1735 = vpack.c.bf16 %v1671, %v1667
        %v1736 = vpack.c.bf16 %v1676, %v1672
        %v1737 = vpack.c.bf16 %v1677, %v1673
        %v1738 = vpack.c.bf16 %v1678, %v1674
        %v1739 = vpack.c.bf16 %v1679, %v1675
        %v1740 = vpack.c.bf16 %v1684, %v1680
        %v1741 = vpack.c.bf16 %v1685, %v1681
        %v1742 = vpack.c.bf16 %v1686, %v1682
        %v1743 = vpack.c.bf16 %v1687, %v1683
        %v1744 = vpack.c.bf16 %v284, %v1688
        %v1745 = vpack.c.bf16 %v285, %v1689
        %v1746 = vpack.c.bf16 %v286, %v1690
        %v1747 = vpack.c.bf16 %v287, %v1691
        %v1748 = vld [vmem:[%s4] sm:$0xff]
        %v1749 = vld [vmem:[%s5] sm:$0xff]
        %1751 = vset.pattern.permute.xlu0 0
        %1752 = vperm.xlu0 %1751, %v1749
        %v1753 = vpop.permute.xlu0 %1752
        %v1756 = vunpack.c.l.b16 %v1748
        %v1757 = vunpack.c.h.b16 %v1748
        %v1758 = vpack.c.b16 %v1756, %v1756
        %v1759 = vpack.c.b16 %v1757, %v1757
        %vm1761 = vcmask 785408
        %v1763 = vsel %vm1761, %v1759, 0
        %1765 = vmatprep.subr.bf16.mxu0 %v1693
        %1766 = vmatpush1.bf16.msra.mxu0 %v1692
        %1767 = vmatprep.subr.bf16.mxu0 %v1697
        %1768 = vmatpush1.bf16.msra.mxu0 %v1696
        %1769 = vmatprep.subr.bf16.mxu0 %v1701
        %1770 = vmatpush1.bf16.msra.mxu0 %v1700
        %1771 = vmatprep.subr.bf16.mxu0 %v1705
        %1772 = vmatpush1.bf16.msra.mxu0 %v1704
        %1773 = vmatprep.subr.bf16.mxu0 %v1709
        %1774 = vmatpush1.bf16.msra.mxu0 %v1708
        %1775 = vmatprep.subr.bf16.mxu0 %v1713
        %1776 = vmatpush1.bf16.msra.mxu0 %v1712
        %1777 = vmatprep.subr.bf16.mxu0 %v1717
        %1778 = vmatpush1.bf16.msra.mxu0 %v1716
        %1779 = vmatprep.subr.bf16.mxu0 %v1721
        %1780 = vmatpush1.bf16.msra.mxu0 %v1720
        %1781 = vmatprep.subr.bf16.mxu0 %v1725
        %1782 = vmatpush1.bf16.msra.mxu0 %v1724
        %1783 = vmatprep.subr.bf16.mxu0 %v1729
        %1784 = vmatpush1.bf16.msra.mxu0 %v1728
        %1785 = vmatprep.subr.bf16.mxu0 %v1733
        %1786 = vmatpush1.bf16.msra.mxu0 %v1732
        %1787 = vmatprep.subr.bf16.mxu0 %v1737
        %1788 = vmatpush1.bf16.msra.mxu0 %v1736
        %1789 = vmatprep.subr.bf16.mxu0 %v1741
        %1790 = vmatpush1.bf16.msra.mxu0 %v1740
        %1791 = vmatprep.subr.bf16.mxu0 %v1745
        %1792 = vmatpush1.bf16.msra.mxu0 %v1744
        %1793 = vmatprep.subr.bf16.mxu0 0
        %1794 = vmatpush1.bf16.msra.mxu0 0
        %1795 = vmatprep.subr.bf16.mxu0 0
        %1796 = vmatpush1.bf16.msra.mxu0 0
        %1797 = vmatprep.mubr.bf16.mxu0 %v1763
        %1798 = vmatmul.mubr.bf16.gmra.mrb[0].mxu0 %v1758
        %v1799 = vpop.f32.mrb[0].mxu0
        %v1800 = vadd.f32 %v1753, %v1799
        %v1801 = vpop.f32.mrb[0].mxu0
        %v1802 = vadd.f32 %v1753, %v1801
        %v1803 = vpop.f32.mrb[0].mxu0
        %v1804 = vpop.f32.mrb[0].mxu0
        %1805 = vdwg.mxu0
        %1806 = vmatprep.subr.bf16.mxu0 %v1695
        %1807 = vmatpush1.bf16.msra.mxu0 %v1694
        %1808 = vmatprep.subr.bf16.mxu0 %v1699
        %1809 = vmatpush1.bf16.msra.mxu0 %v1698
        %1810 = vmatprep.subr.bf16.mxu0 %v1703
        %1811 = vmatpush1.bf16.msra.mxu0 %v1702
        %1812 = vmatprep.subr.bf16.mxu0 %v1707
        %1813 = vmatpush1.bf16.msra.mxu0 %v1706
        %1814 = vmatprep.subr.bf16.mxu0 %v1711
        %1815 = vmatpush1.bf16.msra.mxu0 %v1710
        %1816 = vmatprep.subr.bf16.mxu0 %v1715
        %1817 = vmatpush1.bf16.msra.mxu0 %v1714
        %1818 = vmatprep.subr.bf16.mxu0 %v1719
        %1819 = vmatpush1.bf16.msra.mxu0 %v1718
        %1820 = vmatprep.subr.bf16.mxu0 %v1723
        %1821 = vmatpush1.bf16.msra.mxu0 %v1722
        %1822 = vmatprep.subr.bf16.mxu0 %v1727
        %1823 = vmatpush1.bf16.msra.mxu0 %v1726
        %1824 = vmatprep.subr.bf16.mxu0 %v1731
        %1825 = vmatpush1.bf16.msra.mxu0 %v1730
        %1826 = vmatprep.subr.bf16.mxu0 %v1735
        %1827 = vmatpush1.bf16.msra.mxu0 %v1734
        %1828 = vmatprep.subr.bf16.mxu0 %v1739
        %1829 = vmatpush1.bf16.msra.mxu0 %v1738
        %1830 = vmatprep.subr.bf16.mxu0 %v1743
        %1831 = vmatpush1.bf16.msra.mxu0 %v1742
        %1832 = vmatprep.subr.bf16.mxu0 %v1747
        %1833 = vmatpush1.bf16.msra.mxu0 %v1746
        %1834 = vmatprep.subr.bf16.mxu0 0
        %1835 = vmatpush1.bf16.msra.mxu0 0
        %1836 = vmatprep.subr.bf16.mxu0 0
        %1837 = vmatpush1.bf16.msra.mxu0 0
        %1838 = vmatprep.mubr.bf16.mxu0 %v1763
        %1839 = vmatmul.mubr.bf16.gmra.mrb[0].mxu0 %v1758
        %v1840 = vpop.f32.mrb[0].mxu0
        %v1841 = vadd.f32 %v1753, %v1840
        %v1842 = vpop.f32.mrb[0].mxu0
        %v1843 = vadd.f32 %v1753, %v1842
        %v1844 = vpop.f32.mrb[0].mxu0
        %v1845 = vpop.f32.mrb[0].mxu0
        %1846 = vdwg.mxu0
        %v1847 = vmax.f32 %v1800, 0.0
        %v1848 = vmax.f32 %v1802, 0.0
        %v1849 = vmax.f32 %v1841, 0.0
        %v1850 = vmax.f32 %v1843, 0.0
        %1851 = vst [vmem:[%s282] sm:$0xff] %v1847
        %1852 = vst [vmem:[%s282 + $0x8] sm:$0xff] %v1848
        %1853 = vst [vmem:[%s282 + $0x10] sm:$0xff] %v1849
        %1854 = vst [vmem:[%s282 + $0x18] sm:$0xff] %v1850
        %s1855 = sand.u32 %s163, 1
        %s1856 = scalar_lea.sflag [#allocation4], %s1855
        %s1857 = sand.u32 %s163, 1
        %s1858 = smul.addr %s1857, 32
        %s1859 = scalar_lea.vmem [#allocation7], %s1858
        // Predicated region
        $region53: #{tpu_custom_call.1} parent=43 // pred_check
          %p1860 = pneg %p173
        $region54: #{tpu_custom_call.1} parent=43 // pred_check_branch
          %1862 = sbr.rel (%p1860) target = $region56
        $region55: #{tpu_custom_call.1} parent=43 // pred_region
          %s1864 = ssub.s32 512, 512
          %1865 = vsyncadd %s1856, %s1864
          %s1866 = smul.addr %s24, 4
          %s1867 = smul.addr %s1866, 128
          %s1868 = scalar_lea.hbm %s6, %s1867
          %s1870 = sshll.u32 %s1859, 4
          %s1871 = int_to_ptr.vmem [resolvable:$true] %s1870
          %1873 = dma.vmem_to_hbm [thread:$0]  %s1871, 512, %s1868, %s1856
        $region56: #{tpu_custom_call.1} parent=43 // pred_fallthru
          _
      $region44: #{tpu_custom_call.1} parent=5 // pred_fallthru
        _
      %p1874 = scmp.le.s32.totalorder 2, %s19
      // Predicated region
      $region57: #{tpu_custom_call.1} parent=5 // pred_check
        %p1875 = pneg %p1874
      $region58: #{tpu_custom_call.1} parent=5 // pred_check_branch
        %1877 = sbr.rel (%p1875) target = $region60
      $region59: #{tpu_custom_call.1} parent=5 // pred_region
        %s1878 = ssub.s32 %s19, 2
        // Predicated region
        $region61: #{tpu_custom_call.1} parent=59 // pred_check
          %p1879 = pneg %p179
        $region62: #{tpu_custom_call.1} parent=59 // pred_check_branch
          %1881 = sbr.rel (%p1879) target = $region64
        $region63: #{tpu_custom_call.1} parent=59 // pred_region
          %s1882 = sand.u32 %s164, 1
          %s1883 = scalar_lea.sflag [#allocation4], %s1882
          %s1884 = sand.u32 %s164, 1
          %s1885 = smul.addr %s1884, 32
          %s1886 = scalar_lea.vmem [#allocation7], %s1885
          %1887 = dma.done %s1883, 512
        $region64: #{tpu_custom_call.1} parent=59 // pred_fallthru
          _
      $region60: #{tpu_custom_call.1} parent=5 // pred_fallthru
        _
    $region6: #{tpu_custom_call.1} parent=1 // loop_footer
      %s23 = sadd.s32 1, %s19
    $region7: #{tpu_custom_call.1} parent=1 // loop_footer_branch
      %18 = sbr.rel target = $region3
    $region8: #{tpu_custom_call.1} parent=1 // loop_exit
      _
    %1888 = vsyncpa [#allocation3], 1
    %s1889 = scalar_lea.sflag [#allocation3], 1
    %1890 = vsyncpa %s1889, 1
    %1891 = vsyncpa [#allocation6], 1
    %1892 = vsyncpa [#allocation4], 1
    %s1893 = scalar_lea.sflag [#allocation4], 1
    %1894 = vsyncpa %s1893, 1

</llo_original>
